<compile_context>
chip_gen: v7x
topology: tpu7x:2x2x1
jax: 0.10.0
libtpu: 0.0.40
codegen_flags: <defaults>
</compile_context>

<pallas_src>
import jax
import jax.numpy as jnp
from jax.experimental import pallas as pl
from jax.experimental.pallas import tpu as pltpu


# ----------------------------------------------------------------------------
# Pallas kernel: fused bidirectional masked LSTM recurrence, whole sequence
# ----------------------------------------------------------------------------
def _bilstm_kernel(xg_ref, whh_ref, lens_ref, out_ref, hN_ref, cN_ref, out2_scr):
    # xg_ref   : (T, BB, 8H) precomputed x@W_ih^T + bias,
    #            lanes = [i_f i_b f_f f_b o_f o_b g_f g_b] (original time order)
    # whh_ref  : (2H, 8H)    block-diagonal recurrent weights (rows = [h_f ; h_b])
    # lens_ref : (BB, 1)     int32 sequence lengths (0 for batch-pad rows)
    # out_ref  : (T, BB, H)  summed bidirectional outputs
    # hN/cN    : (BB, H)     forward-direction final states
    # out2_scr : (T, BB, 2H) VMEM scratch: per-step masked [h_fwd | h_bwd]
    T, BB, G = xg_ref.shape
    H = G // 8
    H2 = 2 * H
    H6 = 6 * H

    # ---- hoisted, loop-invariant vectors (broadcasts are NOT CSE'd by JAX) ----
    lens = lens_ref[...]                                            # (BB, 1) int32
    lens2 = jnp.broadcast_to(lens, (BB, H2))                        # (BB, 2H)
    lane2 = jax.lax.broadcasted_iota(jnp.int32, (BB, H2), 1)
    is_fwd2 = lane2 < H                                             # [fwd H | bwd H]
    lane8 = jax.lax.broadcasted_iota(jnp.int32, (BB, G), 1)
    is_fwd8 = (lane8 % H2) < H                                      # fwd lanes of the 8H tile
    # validity: fwd lane valid iff s < len ; bwd lane valid iff s >= T - len
    upper = jnp.where(is_fwd2, lens2, T)                            # (BB, 2H) int32
    lower = jnp.where(is_fwd2, 0, T - lens2)                        # (BB, 2H) int32

    unroll = True if T <= 16 else 8

    def step(s, carry):
        h, c = carry                                                # (BB, 2H) each
        sr = T - 1 - s
        # fwd lanes come from time s, bwd lanes from time T-1-s (in-kernel flip)
        x = jnp.where(is_fwd8, xg_ref[s], xg_ref[sr])               # (BB, 8H)
        gates = x + jnp.dot(h, whh_ref[...],
                            preferred_element_type=jnp.float32)     # (BB, 8H)
        sig = jax.nn.sigmoid(gates[:, :H6])                         # 6H sigmoid lanes only
        g_g = jnp.tanh(gates[:, H6:])                               # 2H tanh lanes only
        i_g = sig[:, 0:H2]
        f_g = sig[:, H2:2 * H2]
        o_g = sig[:, 2 * H2:H6]

        c_new = f_g * c + i_g * g_g
        h_new = o_g * jnp.tanh(c_new)

        valid = (s >= lower) & (s < upper)                          # (BB, 2H) bool
        h_out = jnp.where(valid, h_new, 0.0)                        # unpack(): zero padding
        out2_scr[s] = h_out                                         # ONE 2H-wide store / step

        h_next = jnp.where(valid, h_new, h)                         # freeze past seq end
        c_next = jnp.where(valid, c_new, c)
        return (h_next, c_next)

    zeros = jnp.zeros((BB, H2), jnp.float32)
    h_fin, c_fin = jax.lax.fori_loop(0, T, step, (zeros, zeros), unroll=unroll)

    # finalize: backward time-flip + direction sum (off the serial critical path)
    def fin(t, _):
        a = out2_scr[t]                                             # fwd hidden at time t
        b = out2_scr[T - 1 - t]                                     # bwd hidden at time t
        out_ref[t] = a[:, :H] + b[:, H:]
        return 0
    jax.lax.fori_loop(0, T, fin, 0, unroll=unroll)

    hN_ref[...] = h_fin[:, :H]                                      # fwd final states
    cN_ref[...] = c_fin[:, :H]


def _bilstm_pallas(xg, whh_bd, lens2d, T, Bp, H):
    # Split padded batch across v7x's two TensorCores when it is big enough.
    nb = 2 if (Bp >= 16 and Bp % 16 == 0) else 1
    BB = Bp // nb
    out_shapes = (
        jax.ShapeDtypeStruct((T, Bp, H), jnp.float32),
        jax.ShapeDtypeStruct((Bp, H), jnp.float32),
        jax.ShapeDtypeStruct((Bp, H), jnp.float32),
    )
    return pl.pallas_call(
        _bilstm_kernel,
        out_shape=out_shapes,
        grid_spec=pltpu.PrefetchScalarGridSpec(
            num_scalar_prefetch=0,
            grid=(nb,),
            in_specs=[
                pl.BlockSpec((T, BB, 8 * H), lambda i: (0, i, 0)),   # input-gate pre-acts
                pl.BlockSpec((2 * H, 8 * H), lambda i: (0, 0)),      # block-diag W_hh
                pl.BlockSpec((BB, 1), lambda i: (i, 0)),             # lengths
            ],
            out_specs=[
                pl.BlockSpec((T, BB, H), lambda i: (0, i, 0)),       # outputs
                pl.BlockSpec((BB, H), lambda i: (i, 0)),             # h_N (fwd)
                pl.BlockSpec((BB, H), lambda i: (i, 0)),             # c_N (fwd)
            ],
            scratch_shapes=[pltpu.VMEM((T, BB, 2 * H), jnp.float32)],
        ),
        compiler_params=pltpu.CompilerParams(
            dimension_semantics=("parallel",)),
    )(xg, whh_bd, lens2d)


# ----------------------------------------------------------------------------
# One-time parameter preparation (hoisted out of the per-call forward)
# ----------------------------------------------------------------------------
def prepare_params(params):
    """Pack PyTorch-layout LSTM weights (gate order i,f,g,o) into the kernel's
    fused layout: lanes [i_f i_b f_f f_b o_f o_b g_f g_b] (gate order i,f,o,g)."""
    E = params["embedding"].shape[1]
    H = params["w_hh_f"].shape[1]
    perm = jnp.array([0, 1, 3, 2])          # (i, f, g, o) -> (i, f, o, g)

    def pack_ih(w):                          # (4H, E) -> (4, H, E), reordered gates
        return w.reshape(4, H, E)[perm]

    wih = jnp.stack([pack_ih(params["w_ih_f"]), pack_ih(params["w_ih_b"])], axis=1)
    wih_fused = wih.reshape(8 * H, E).T      # (E, 8H)

    def pack_b(b_ih, b_hh):
        return (b_ih + b_hh).reshape(4, H)[perm]

    bias = jnp.stack([pack_b(params["b_ih_f"], params["b_hh_f"]),
                      pack_b(params["b_ih_b"], params["b_hh_b"])], axis=1)
    bias_fused = bias.reshape(8 * H)

    def pack_hh(w):                          # (4H, H_in) -> (H_in, 4, H_out), reordered
        return jnp.transpose(w.reshape(4, H, H), (2, 0, 1))[:, perm, :]

    zero = jnp.zeros((H, 4, H), jnp.float32)
    top = jnp.stack([pack_hh(params["w_hh_f"]), zero], axis=2).reshape(H, 8 * H)
    bot = jnp.stack([zero, pack_hh(params["w_hh_b"])], axis=2).reshape(H, 8 * H)
    whh_bd = jnp.concatenate([top, bot], axis=0)     # (2H, 8H) block-diagonal

    return {"embedding": params["embedding"], "wih_fused": wih_fused,
            "bias_fused": bias_fused, "whh_bd": whh_bd, "H": H, "E": E}


# ----------------------------------------------------------------------------
# rnn_encoder forward (bidirectional LSTM, enc_num_layers=1, dropout ignored)
# ----------------------------------------------------------------------------
def rnn_encoder_forward(prep, inputs, lengths):
    """inputs: (T, B) int32, lengths: (B,) int32 (sorted descending, like pack())."""
    T, B = inputs.shape
    H = prep["H"]

    # Pad batch to a multiple of 8 sublanes; pad rows get length 0 (fully masked).
    Bp = ((B + 7) // 8) * 8
    if Bp != B:
        inputs = jnp.pad(inputs, ((0, 0), (0, Bp - B)))
        lengths = jnp.pad(lengths, (0, Bp - B))
    lens2d = lengths.astype(jnp.int32)[:, None]                         # (Bp, 1)

    # Embedding + hoisted input projection for all timesteps / both directions.
    embs = jnp.take(prep["embedding"], inputs, axis=0)                  # (T, Bp, E)
    xg = jnp.einsum('tbe,eg->tbg', embs, prep["wih_fused"]) + prep["bias_fused"]

    outputs, h_f, c_f = _bilstm_pallas(xg, prep["whh_bd"], lens2d, T, Bp, H)

    if Bp != B:
        outputs, h_f, c_f = outputs[:, :B], h_f[:B], c_f[:B]

    # state = (h[::2], c[::2]) -> forward-direction states only (layer 0)
    return outputs, (h_f[None], c_f[None])


# ----------------------------------------------------------------------------
# Pure-JAX reference (lax.scan) for validation
# ----------------------------------------------------------------------------
def _lstm_ref(x, lengths, w_ih, w_hh, b_ih, b_hh):
    T, B, E = x.shape
    H = w_hh.shape[1]
    wih_t, whh_t, bias = w_ih.T, w_hh.T, (b_ih + b_hh)[None, :]

    def step(carry, xt_t):
        h, c = carry
        xt, t = xt_t
        gates = xt @ wih_t + h @ whh_t + bias
        i = jax.nn.sigmoid(gates[:, :H])
        f = jax.nn.sigmoid(gates[:, H:2 * H])
        g = jnp.tanh(gates[:, 2 * H:3 * H])
        o = jax.nn.sigmoid(gates[:, 3 * H:])
        c_new = f * c + i * g
        h_new = o * jnp.tanh(c_new)
        valid = (lengths > t)[:, None]
        h2 = jnp.where(valid, h_new, h)
        c2 = jnp.where(valid, c_new, c)
        return (h2, c2), jnp.where(valid, h_new, 0.0)

    init = (jnp.zeros((B, H), jnp.float32), jnp.zeros((B, H), jnp.float32))
    (hN, cN), outs = jax.lax.scan(step, init, (x, jnp.arange(T)))
    return outs, hN, cN


def rnn_encoder_ref(params, inputs, lengths):
    T, B = inputs.shape
    embs = jnp.take(params["embedding"], inputs, axis=0)
    out_f, h_f, c_f = _lstm_ref(embs, lengths, params["w_ih_f"],
                                params["w_hh_f"], params["b_ih_f"], params["b_hh_f"])
    t_idx = jnp.arange(T)[:, None]
    rev_src = lengths[None, :] - 1 - t_idx
    rev_clip = jnp.clip(rev_src, 0, T - 1)
    rev_x = jnp.take_along_axis(embs, rev_clip[:, :, None], axis=0)
    out_b_rev, h_b, c_b = _lstm_ref(rev_x, lengths, params["w_ih_b"],
                                    params["w_hh_b"], params["b_ih_b"], params["b_hh_b"])
    out_b = jnp.take_along_axis(out_b_rev, rev_clip[:, :, None], axis=0)
    out_b = jnp.where((rev_src >= 0)[:, :, None], out_b, 0.0)
    return out_f + out_b, (h_f[None], c_f[None])


# ----------------------------------------------------------------------------
if __name__ == "__main__":
    # config: src_vocab_size=50, emb_size=32, encoder_hidden_size=32,
    #         enc_num_layers=1, cell='lstm', bidirectional=True, dropout=0
    # TODO(synk): GRU cell, enc_num_layers > 1 stacking and inter-layer dropout
    #             are not implemented (this covers the LSTM/bidirectional path).
    V, E, H, T, B = 50, 32, 32, 8, 4

    key = jax.random.PRNGKey(0)
    ks = jax.random.split(key, 12)
    scale = 1.0 / jnp.sqrt(H)

    def init(k, shape):
        return (jax.random.uniform(k, shape, jnp.float32) * 2.0 - 1.0) * scale

    params = {
        "embedding": jax.random.normal(ks[0], (V, E), jnp.float32) * 0.1,
        "w_ih_f": init(ks[1], (4 * H, E)), "w_hh_f": init(ks[2], (4 * H, H)),
        "b_ih_f": init(ks[3], (4 * H,)),   "b_hh_f": init(ks[4], (4 * H,)),
        "w_ih_b": init(ks[5], (4 * H, E)), "w_hh_b": init(ks[6], (4 * H, H)),
        "b_ih_b": init(ks[7], (4 * H,)),   "b_hh_b": init(ks[8], (4 * H,)),
    }

    inputs = jax.random.randint(ks[9], (T, B), 0, V, dtype=jnp.int32)
    lengths = jnp.array([8, 7, 5, 3], dtype=jnp.int32)   # sorted desc (pack requirement)

    prep = prepare_params(params)                         # one-time packing
    outputs, (h_state, c_state) = rnn_encoder_forward(prep, inputs, lengths)
    jax.block_until_ready((outputs, h_state, c_state))

    ref_out, (ref_h, ref_c) = rnn_encoder_ref(params, inputs, lengths)
    assert outputs.shape == (T, B, H)
    assert h_state.shape == (1, B, H) and c_state.shape == (1, B, H)
    assert jnp.allclose(outputs, ref_out, atol=1e-5, rtol=1e-5)
    assert jnp.allclose(h_state, ref_h, atol=1e-5, rtol=1e-5)
    assert jnp.allclose(c_state, ref_c, atol=1e-5, rtol=1e-5)

    print("KERNEL_OK")
</pallas_src>

<mosaic_0001>
module attributes {stable_mosaic.version = 11 : i64} {
  func.func @_bilstm_kernel(%arg0: i32, %arg1: memref<8x8x256xf32, #tpu.memory_space<vmem>>, %arg2: memref<64x256xf32, #tpu.memory_space<vmem>>, %arg3: memref<8x1xi32, #tpu.memory_space<vmem>>, %arg4: memref<8x8x32xf32, #tpu.memory_space<vmem>>, %arg5: memref<8x32xf32, #tpu.memory_space<vmem>>, %arg6: memref<8x32xf32, #tpu.memory_space<vmem>>, %arg7: memref<8x8x64xf32, #tpu.memory_space<vmem>>) attributes {dimension_semantics = [#tpu.dimension_semantics<parallel>], iteration_bounds = array<i64: 1>, scalar_prefetch = 0 : i64, scratch_operands = 1 : i64, tpu.core_type = #tpu.core_type<tc>, window_params = [{transform_indices = @transform_0, window_bounds = array<i64: 8, 8, 256>}, {pipeline_mode = #tpu.pipeline_mode<synchronous>, transform_indices = @transform_1, window_bounds = array<i64: 64, 256>}, {transform_indices = @transform_2, window_bounds = array<i64: 8, 1>}, {transform_indices = @transform_3, window_bounds = array<i64: 8, 8, 32>}, {transform_indices = @transform_4, window_bounds = array<i64: 8, 32>}, {transform_indices = @transform_5, window_bounds = array<i64: 8, 32>}]} {
    %c0 = arith.constant 0 : index
    %c0_0 = arith.constant 0 : index
    %0 = vector.load %arg3[%c0, %c0_0] : memref<8x1xi32, #tpu.memory_space<vmem>>, vector<8x1xi32>
    %1 = vector.shape_cast %0 : vector<8x1xi32> to vector<8x1xi32>
    %2 = vector.broadcast %1 : vector<8x1xi32> to vector<8x64xi32>
    %3 = tpu.iota {dimensions = array<i32: 1>} : vector<8x64xi32>
    %c32_i32 = arith.constant 32 : i32
    %4 = vector.broadcast %c32_i32 : i32 to vector<8x64xi32>
    %5 = arith.cmpi slt, %3, %4 : vector<8x64xi32>
    %6 = tpu.iota {dimensions = array<i32: 1>} : vector<8x256xi32>
    %c64_i32 = arith.constant 64 : i32
    %c0_i32 = arith.constant 0 : i32
    %7 = arith.cmpi eq, %c64_i32, %c0_i32 : i32
    %c1_i32 = arith.constant 1 : i32
    %8 = arith.select %7, %c1_i32, %c64_i32 : i32
    %9 = vector.broadcast %8 : i32 to vector<8x256xi32>
    %10 = arith.remsi %6, %9 : vector<8x256xi32>
    %c0_i32_1 = arith.constant 0 : i32
    %11 = vector.broadcast %c0_i32_1 : i32 to vector<8x256xi32>
    %12 = arith.cmpi ne, %10, %11 : vector<8x256xi32>
    %c0_i32_2 = arith.constant 0 : i32
    %13 = vector.broadcast %c0_i32_2 : i32 to vector<8x256xi32>
    %14 = arith.cmpi slt, %10, %13 : vector<8x256xi32>
    %c0_i32_3 = arith.constant 0 : i32
    %15 = arith.cmpi slt, %8, %c0_i32_3 : i32
    %16 = vector.broadcast %15 : i1 to vector<8x256xi1>
    %17 = vector.broadcast %16 : vector<8x256xi1> to vector<8x256xi1>
    %18 = arith.xori %14, %17 : vector<8x256xi1>
    %19 = arith.andi %18, %12 : vector<8x256xi1>
    %20 = vector.broadcast %8 : i32 to vector<8x256xi32>
    %21 = arith.addi %10, %20 : vector<8x256xi32>
    %22 = arith.select %19, %21, %10 : vector<8x256xi1>, vector<8x256xi32>
    %c32_i32_4 = arith.constant 32 : i32
    %23 = vector.broadcast %c32_i32_4 : i32 to vector<8x256xi32>
    %24 = arith.cmpi slt, %22, %23 : vector<8x256xi32>
    %c8_i32 = arith.constant 8 : i32
    %25 = vector.broadcast %c8_i32 : i32 to vector<8x64xi32>
    %26 = arith.select %5, %2, %25 : vector<8x64xi1>, vector<8x64xi32>
    %c8_i32_5 = arith.constant 8 : i32
    %27 = vector.broadcast %c8_i32_5 : i32 to vector<8x64xi32>
    %28 = arith.subi %27, %2 : vector<8x64xi32>
    %c0_i32_6 = arith.constant 0 : i32
    %29 = vector.broadcast %c0_i32_6 : i32 to vector<8x64xi32>
    %30 = arith.select %5, %29, %28 : vector<8x64xi1>, vector<8x64xi32>
    %cst = arith.constant 0.000000e+00 : f32
    %31 = vector.broadcast %cst : f32 to vector<8x64xf32>
    %c0_i32_7 = arith.constant 0 : i32
    %c7_i32 = arith.constant 7 : i32
    %32 = arith.subi %c7_i32, %c0_i32_7 : i32
    %33 = arith.index_cast %c0_i32_7 : i32 to index
    %c0_8 = arith.constant 0 : index
    %c0_9 = arith.constant 0 : index
    %34 = vector.load %arg1[%33, %c0_8, %c0_9] : memref<8x8x256xf32, #tpu.memory_space<vmem>>, vector<1x8x256xf32>
    %35 = vector.shape_cast %34 : vector<1x8x256xf32> to vector<8x256xf32>
    %36 = arith.index_cast %32 : i32 to index
    %c0_10 = arith.constant 0 : index
    %c0_11 = arith.constant 0 : index
    %37 = vector.load %arg1[%36, %c0_10, %c0_11] : memref<8x8x256xf32, #tpu.memory_space<vmem>>, vector<1x8x256xf32>
    %38 = vector.shape_cast %37 : vector<1x8x256xf32> to vector<8x256xf32>
    %39 = arith.select %24, %35, %38 : vector<8x256xi1>, vector<8x256xf32>
    %c0_12 = arith.constant 0 : index
    %c0_13 = arith.constant 0 : index
    %40 = vector.load %arg2[%c0_12, %c0_13] : memref<64x256xf32, #tpu.memory_space<vmem>>, vector<64x256xf32>
    %cst_14 = arith.constant dense<0.000000e+00> : vector<8x256xf32>
    %41 = tpu.matmul %31, %40, %cst_14 {dimension_numbers = #tpu.dot_dimension_numbers<[1], [0], [0], [1], [0, 0, 1, 1], [], []>} : vector<8x64xf32>, vector<64x256xf32>, vector<8x256xf32> -> vector<8x256xf32>
    %42 = arith.addf %39, %41 : vector<8x256xf32>
    %43 = vector.extract_strided_slice %42 {offsets = [0, 0], sizes = [8, 192], strides = [1, 1]} : vector<8x256xf32> to vector<8x192xf32>
    %44 = arith.negf %43 : vector<8x192xf32>
    %45 = math.exp %44 : vector<8x192xf32>
    %cst_15 = arith.constant 1.000000e+00 : f32
    %46 = vector.broadcast %cst_15 : f32 to vector<8x192xf32>
    %47 = arith.addf %46, %45 : vector<8x192xf32>
    %48 = arith.divf %46, %47 : vector<8x192xf32>
    %49 = vector.extract_strided_slice %42 {offsets = [0, 192], sizes = [8, 64], strides = [1, 1]} : vector<8x256xf32> to vector<8x64xf32>
    %50 = math.tanh %49 : vector<8x64xf32>
    %51 = vector.extract_strided_slice %48 {offsets = [0, 0], sizes = [8, 64], strides = [1, 1]} : vector<8x192xf32> to vector<8x64xf32>
    %52 = vector.extract_strided_slice %48 {offsets = [0, 64], sizes = [8, 64], strides = [1, 1]} : vector<8x192xf32> to vector<8x64xf32>
    %53 = vector.extract_strided_slice %48 {offsets = [0, 128], sizes = [8, 64], strides = [1, 1]} : vector<8x192xf32> to vector<8x64xf32>
    %54 = arith.mulf %52, %31 : vector<8x64xf32>
    %55 = arith.mulf %51, %50 : vector<8x64xf32>
    %56 = arith.addf %54, %55 : vector<8x64xf32>
    %57 = math.tanh %56 : vector<8x64xf32>
    %58 = arith.mulf %53, %57 : vector<8x64xf32>
    %59 = vector.broadcast %c0_i32_7 : i32 to vector<8x64xi32>
    %60 = arith.cmpi sge, %59, %30 : vector<8x64xi32>
    %61 = vector.broadcast %c0_i32_7 : i32 to vector<8x64xi32>
    %62 = arith.cmpi slt, %61, %26 : vector<8x64xi32>
    %63 = arith.andi %60, %62 : vector<8x64xi1>
    %cst_16 = arith.constant 0.000000e+00 : f32
    %64 = vector.broadcast %cst_16 : f32 to vector<8x64xf32>
    %65 = arith.select %63, %58, %64 : vector<8x64xi1>, vector<8x64xf32>
    %66 = arith.index_cast %c0_i32_7 : i32 to index
    %c0_17 = arith.constant 0 : index
    %c0_18 = arith.constant 0 : index
    %67 = vector.load %arg7[%66, %c0_17, %c0_18] : memref<8x8x64xf32, #tpu.memory_space<vmem>>, vector<1x8x64xf32>
    %68 = vector.shape_cast %67 : vector<1x8x64xf32> to vector<8x64xf32>
    %69 = vector.shape_cast %65 : vector<8x64xf32> to vector<1x8x64xf32>
    tpu.vector_store %arg7[%66, %c0_17, %c0_18], %69 {strides = array<i32>} : memref<8x8x64xf32, #tpu.memory_space<vmem>>, vector<1x8x64xf32>,
    %70 = arith.select %63, %58, %31 : vector<8x64xi1>, vector<8x64xf32>
    %71 = arith.select %63, %56, %31 : vector<8x64xi1>, vector<8x64xf32>
    %c1_i32_19 = arith.constant 1 : i32
    %c7_i32_20 = arith.constant 7 : i32
    %72 = arith.subi %c7_i32_20, %c1_i32_19 : i32
    %73 = arith.index_cast %c1_i32_19 : i32 to index
    %c0_21 = arith.constant 0 : index
    %c0_22 = arith.constant 0 : index
    %74 = vector.load %arg1[%73, %c0_21, %c0_22] : memref<8x8x256xf32, #tpu.memory_space<vmem>>, vector<1x8x256xf32>
    %75 = vector.shape_cast %74 : vector<1x8x256xf32> to vector<8x256xf32>
    %76 = arith.index_cast %72 : i32 to index
    %c0_23 = arith.constant 0 : index
    %c0_24 = arith.constant 0 : index
    %77 = vector.load %arg1[%76, %c0_23, %c0_24] : memref<8x8x256xf32, #tpu.memory_space<vmem>>, vector<1x8x256xf32>
    %78 = vector.shape_cast %77 : vector<1x8x256xf32> to vector<8x256xf32>
    %79 = arith.select %24, %75, %78 : vector<8x256xi1>, vector<8x256xf32>
    %c0_25 = arith.constant 0 : index
    %c0_26 = arith.constant 0 : index
    %80 = vector.load %arg2[%c0_25, %c0_26] : memref<64x256xf32, #tpu.memory_space<vmem>>, vector<64x256xf32>
    %cst_27 = arith.constant dense<0.000000e+00> : vector<8x256xf32>
    %81 = tpu.matmul %70, %80, %cst_27 {dimension_numbers = #tpu.dot_dimension_numbers<[1], [0], [0], [1], [0, 0, 1, 1], [], []>} : vector<8x64xf32>, vector<64x256xf32>, vector<8x256xf32> -> vector<8x256xf32>
    %82 = arith.addf %79, %81 : vector<8x256xf32>
    %83 = vector.extract_strided_slice %82 {offsets = [0, 0], sizes = [8, 192], strides = [1, 1]} : vector<8x256xf32> to vector<8x192xf32>
    %84 = arith.negf %83 : vector<8x192xf32>
    %85 = math.exp %84 : vector<8x192xf32>
    %cst_28 = arith.constant 1.000000e+00 : f32
    %86 = vector.broadcast %cst_28 : f32 to vector<8x192xf32>
    %87 = arith.addf %86, %85 : vector<8x192xf32>
    %88 = arith.divf %86, %87 : vector<8x192xf32>
    %89 = vector.extract_strided_slice %82 {offsets = [0, 192], sizes = [8, 64], strides = [1, 1]} : vector<8x256xf32> to vector<8x64xf32>
    %90 = math.tanh %89 : vector<8x64xf32>
    %91 = vector.extract_strided_slice %88 {offsets = [0, 0], sizes = [8, 64], strides = [1, 1]} : vector<8x192xf32> to vector<8x64xf32>
    %92 = vector.extract_strided_slice %88 {offsets = [0, 64], sizes = [8, 64], strides = [1, 1]} : vector<8x192xf32> to vector<8x64xf32>
    %93 = vector.extract_strided_slice %88 {offsets = [0, 128], sizes = [8, 64], strides = [1, 1]} : vector<8x192xf32> to vector<8x64xf32>
    %94 = arith.mulf %92, %71 : vector<8x64xf32>
    %95 = arith.mulf %91, %90 : vector<8x64xf32>
    %96 = arith.addf %94, %95 : vector<8x64xf32>
    %97 = math.tanh %96 : vector<8x64xf32>
    %98 = arith.mulf %93, %97 : vector<8x64xf32>
    %99 = vector.broadcast %c1_i32_19 : i32 to vector<8x64xi32>
    %100 = arith.cmpi sge, %99, %30 : vector<8x64xi32>
    %101 = vector.broadcast %c1_i32_19 : i32 to vector<8x64xi32>
    %102 = arith.cmpi slt, %101, %26 : vector<8x64xi32>
    %103 = arith.andi %100, %102 : vector<8x64xi1>
    %cst_29 = arith.constant 0.000000e+00 : f32
    %104 = vector.broadcast %cst_29 : f32 to vector<8x64xf32>
    %105 = arith.select %103, %98, %104 : vector<8x64xi1>, vector<8x64xf32>
    %106 = arith.index_cast %c1_i32_19 : i32 to index
    %c0_30 = arith.constant 0 : index
    %c0_31 = arith.constant 0 : index
    %107 = vector.load %arg7[%106, %c0_30, %c0_31] : memref<8x8x64xf32, #tpu.memory_space<vmem>>, vector<1x8x64xf32>
    %108 = vector.shape_cast %107 : vector<1x8x64xf32> to vector<8x64xf32>
    %109 = vector.shape_cast %105 : vector<8x64xf32> to vector<1x8x64xf32>
    tpu.vector_store %arg7[%106, %c0_30, %c0_31], %109 {strides = array<i32>} : memref<8x8x64xf32, #tpu.memory_space<vmem>>, vector<1x8x64xf32>,
    %110 = arith.select %103, %98, %70 : vector<8x64xi1>, vector<8x64xf32>
    %111 = arith.select %103, %96, %71 : vector<8x64xi1>, vector<8x64xf32>
    %c2_i32 = arith.constant 2 : i32
    %c7_i32_32 = arith.constant 7 : i32
    %112 = arith.subi %c7_i32_32, %c2_i32 : i32
    %113 = arith.index_cast %c2_i32 : i32 to index
    %c0_33 = arith.constant 0 : index
    %c0_34 = arith.constant 0 : index
    %114 = vector.load %arg1[%113, %c0_33, %c0_34] : memref<8x8x256xf32, #tpu.memory_space<vmem>>, vector<1x8x256xf32>
    %115 = vector.shape_cast %114 : vector<1x8x256xf32> to vector<8x256xf32>
    %116 = arith.index_cast %112 : i32 to index
    %c0_35 = arith.constant 0 : index
    %c0_36 = arith.constant 0 : index
    %117 = vector.load %arg1[%116, %c0_35, %c0_36] : memref<8x8x256xf32, #tpu.memory_space<vmem>>, vector<1x8x256xf32>
    %118 = vector.shape_cast %117 : vector<1x8x256xf32> to vector<8x256xf32>
    %119 = arith.select %24, %115, %118 : vector<8x256xi1>, vector<8x256xf32>
    %c0_37 = arith.constant 0 : index
    %c0_38 = arith.constant 0 : index
    %120 = vector.load %arg2[%c0_37, %c0_38] : memref<64x256xf32, #tpu.memory_space<vmem>>, vector<64x256xf32>
    %cst_39 = arith.constant dense<0.000000e+00> : vector<8x256xf32>
    %121 = tpu.matmul %110, %120, %cst_39 {dimension_numbers = #tpu.dot_dimension_numbers<[1], [0], [0], [1], [0, 0, 1, 1], [], []>} : vector<8x64xf32>, vector<64x256xf32>, vector<8x256xf32> -> vector<8x256xf32>
    %122 = arith.addf %119, %121 : vector<8x256xf32>
    %123 = vector.extract_strided_slice %122 {offsets = [0, 0], sizes = [8, 192], strides = [1, 1]} : vector<8x256xf32> to vector<8x192xf32>
    %124 = arith.negf %123 : vector<8x192xf32>
    %125 = math.exp %124 : vector<8x192xf32>
    %cst_40 = arith.constant 1.000000e+00 : f32
    %126 = vector.broadcast %cst_40 : f32 to vector<8x192xf32>
    %127 = arith.addf %126, %125 : vector<8x192xf32>
    %128 = arith.divf %126, %127 : vector<8x192xf32>
    %129 = vector.extract_strided_slice %122 {offsets = [0, 192], sizes = [8, 64], strides = [1, 1]} : vector<8x256xf32> to vector<8x64xf32>
    %130 = math.tanh %129 : vector<8x64xf32>
    %131 = vector.extract_strided_slice %128 {offsets = [0, 0], sizes = [8, 64], strides = [1, 1]} : vector<8x192xf32> to vector<8x64xf32>
    %132 = vector.extract_strided_slice %128 {offsets = [0, 64], sizes = [8, 64], strides = [1, 1]} : vector<8x192xf32> to vector<8x64xf32>
    %133 = vector.extract_strided_slice %128 {offsets = [0, 128], sizes = [8, 64], strides = [1, 1]} : vector<8x192xf32> to vector<8x64xf32>
    %134 = arith.mulf %132, %111 : vector<8x64xf32>
    %135 = arith.mulf %131, %130 : vector<8x64xf32>
    %136 = arith.addf %134, %135 : vector<8x64xf32>
    %137 = math.tanh %136 : vector<8x64xf32>
    %138 = arith.mulf %133, %137 : vector<8x64xf32>
    %139 = vector.broadcast %c2_i32 : i32 to vector<8x64xi32>
    %140 = arith.cmpi sge, %139, %30 : vector<8x64xi32>
    %141 = vector.broadcast %c2_i32 : i32 to vector<8x64xi32>
    %142 = arith.cmpi slt, %141, %26 : vector<8x64xi32>
    %143 = arith.andi %140, %142 : vector<8x64xi1>
    %cst_41 = arith.constant 0.000000e+00 : f32
    %144 = vector.broadcast %cst_41 : f32 to vector<8x64xf32>
    %145 = arith.select %143, %138, %144 : vector<8x64xi1>, vector<8x64xf32>
    %146 = arith.index_cast %c2_i32 : i32 to index
    %c0_42 = arith.constant 0 : index
    %c0_43 = arith.constant 0 : index
    %147 = vector.load %arg7[%146, %c0_42, %c0_43] : memref<8x8x64xf32, #tpu.memory_space<vmem>>, vector<1x8x64xf32>
    %148 = vector.shape_cast %147 : vector<1x8x64xf32> to vector<8x64xf32>
    %149 = vector.shape_cast %145 : vector<8x64xf32> to vector<1x8x64xf32>
    tpu.vector_store %arg7[%146, %c0_42, %c0_43], %149 {strides = array<i32>} : memref<8x8x64xf32, #tpu.memory_space<vmem>>, vector<1x8x64xf32>,
    %150 = arith.select %143, %138, %110 : vector<8x64xi1>, vector<8x64xf32>
    %151 = arith.select %143, %136, %111 : vector<8x64xi1>, vector<8x64xf32>
    %c3_i32 = arith.constant 3 : i32
    %c7_i32_44 = arith.constant 7 : i32
    %152 = arith.subi %c7_i32_44, %c3_i32 : i32
    %153 = arith.index_cast %c3_i32 : i32 to index
    %c0_45 = arith.constant 0 : index
    %c0_46 = arith.constant 0 : index
    %154 = vector.load %arg1[%153, %c0_45, %c0_46] : memref<8x8x256xf32, #tpu.memory_space<vmem>>, vector<1x8x256xf32>
    %155 = vector.shape_cast %154 : vector<1x8x256xf32> to vector<8x256xf32>
    %156 = arith.index_cast %152 : i32 to index
    %c0_47 = arith.constant 0 : index
    %c0_48 = arith.constant 0 : index
    %157 = vector.load %arg1[%156, %c0_47, %c0_48] : memref<8x8x256xf32, #tpu.memory_space<vmem>>, vector<1x8x256xf32>
    %158 = vector.shape_cast %157 : vector<1x8x256xf32> to vector<8x256xf32>
    %159 = arith.select %24, %155, %158 : vector<8x256xi1>, vector<8x256xf32>
    %c0_49 = arith.constant 0 : index
    %c0_50 = arith.constant 0 : index
    %160 = vector.load %arg2[%c0_49, %c0_50] : memref<64x256xf32, #tpu.memory_space<vmem>>, vector<64x256xf32>
    %cst_51 = arith.constant dense<0.000000e+00> : vector<8x256xf32>
    %161 = tpu.matmul %150, %160, %cst_51 {dimension_numbers = #tpu.dot_dimension_numbers<[1], [0], [0], [1], [0, 0, 1, 1], [], []>} : vector<8x64xf32>, vector<64x256xf32>, vector<8x256xf32> -> vector<8x256xf32>
    %162 = arith.addf %159, %161 : vector<8x256xf32>
    %163 = vector.extract_strided_slice %162 {offsets = [0, 0], sizes = [8, 192], strides = [1, 1]} : vector<8x256xf32> to vector<8x192xf32>
    %164 = arith.negf %163 : vector<8x192xf32>
    %165 = math.exp %164 : vector<8x192xf32>
    %cst_52 = arith.constant 1.000000e+00 : f32
    %166 = vector.broadcast %cst_52 : f32 to vector<8x192xf32>
    %167 = arith.addf %166, %165 : vector<8x192xf32>
    %168 = arith.divf %166, %167 : vector<8x192xf32>
    %169 = vector.extract_strided_slice %162 {offsets = [0, 192], sizes = [8, 64], strides = [1, 1]} : vector<8x256xf32> to vector<8x64xf32>
    %170 = math.tanh %169 : vector<8x64xf32>
    %171 = vector.extract_strided_slice %168 {offsets = [0, 0], sizes = [8, 64], strides = [1, 1]} : vector<8x192xf32> to vector<8x64xf32>
    %172 = vector.extract_strided_slice %168 {offsets = [0, 64], sizes = [8, 64], strides = [1, 1]} : vector<8x192xf32> to vector<8x64xf32>
    %173 = vector.extract_strided_slice %168 {offsets = [0, 128], sizes = [8, 64], strides = [1, 1]} : vector<8x192xf32> to vector<8x64xf32>
    %174 = arith.mulf %172, %151 : vector<8x64xf32>
    %175 = arith.mulf %171, %170 : vector<8x64xf32>
    %176 = arith.addf %174, %175 : vector<8x64xf32>
    %177 = math.tanh %176 : vector<8x64xf32>
    %178 = arith.mulf %173, %177 : vector<8x64xf32>
    %179 = vector.broadcast %c3_i32 : i32 to vector<8x64xi32>
    %180 = arith.cmpi sge, %179, %30 : vector<8x64xi32>
    %181 = vector.broadcast %c3_i32 : i32 to vector<8x64xi32>
    %182 = arith.cmpi slt, %181, %26 : vector<8x64xi32>
    %183 = arith.andi %180, %182 : vector<8x64xi1>
    %cst_53 = arith.constant 0.000000e+00 : f32
    %184 = vector.broadcast %cst_53 : f32 to vector<8x64xf32>
    %185 = arith.select %183, %178, %184 : vector<8x64xi1>, vector<8x64xf32>
    %186 = arith.index_cast %c3_i32 : i32 to index
    %c0_54 = arith.constant 0 : index
    %c0_55 = arith.constant 0 : index
    %187 = vector.load %arg7[%186, %c0_54, %c0_55] : memref<8x8x64xf32, #tpu.memory_space<vmem>>, vector<1x8x64xf32>
    %188 = vector.shape_cast %187 : vector<1x8x64xf32> to vector<8x64xf32>
    %189 = vector.shape_cast %185 : vector<8x64xf32> to vector<1x8x64xf32>
    tpu.vector_store %arg7[%186, %c0_54, %c0_55], %189 {strides = array<i32>} : memref<8x8x64xf32, #tpu.memory_space<vmem>>, vector<1x8x64xf32>,
    %190 = arith.select %183, %178, %150 : vector<8x64xi1>, vector<8x64xf32>
    %191 = arith.select %183, %176, %151 : vector<8x64xi1>, vector<8x64xf32>
    %c4_i32 = arith.constant 4 : i32
    %c7_i32_56 = arith.constant 7 : i32
    %192 = arith.subi %c7_i32_56, %c4_i32 : i32
    %193 = arith.index_cast %c4_i32 : i32 to index
    %c0_57 = arith.constant 0 : index
    %c0_58 = arith.constant 0 : index
    %194 = vector.load %arg1[%193, %c0_57, %c0_58] : memref<8x8x256xf32, #tpu.memory_space<vmem>>, vector<1x8x256xf32>
    %195 = vector.shape_cast %194 : vector<1x8x256xf32> to vector<8x256xf32>
    %196 = arith.index_cast %192 : i32 to index
    %c0_59 = arith.constant 0 : index
    %c0_60 = arith.constant 0 : index
    %197 = vector.load %arg1[%196, %c0_59, %c0_60] : memref<8x8x256xf32, #tpu.memory_space<vmem>>, vector<1x8x256xf32>
    %198 = vector.shape_cast %197 : vector<1x8x256xf32> to vector<8x256xf32>
    %199 = arith.select %24, %195, %198 : vector<8x256xi1>, vector<8x256xf32>
    %c0_61 = arith.constant 0 : index
    %c0_62 = arith.constant 0 : index
    %200 = vector.load %arg2[%c0_61, %c0_62] : memref<64x256xf32, #tpu.memory_space<vmem>>, vector<64x256xf32>
    %cst_63 = arith.constant dense<0.000000e+00> : vector<8x256xf32>
    %201 = tpu.matmul %190, %200, %cst_63 {dimension_numbers = #tpu.dot_dimension_numbers<[1], [0], [0], [1], [0, 0, 1, 1], [], []>} : vector<8x64xf32>, vector<64x256xf32>, vector<8x256xf32> -> vector<8x256xf32>
    %202 = arith.addf %199, %201 : vector<8x256xf32>
    %203 = vector.extract_strided_slice %202 {offsets = [0, 0], sizes = [8, 192], strides = [1, 1]} : vector<8x256xf32> to vector<8x192xf32>
    %204 = arith.negf %203 : vector<8x192xf32>
    %205 = math.exp %204 : vector<8x192xf32>
    %cst_64 = arith.constant 1.000000e+00 : f32
    %206 = vector.broadcast %cst_64 : f32 to vector<8x192xf32>
    %207 = arith.addf %206, %205 : vector<8x192xf32>
    %208 = arith.divf %206, %207 : vector<8x192xf32>
    %209 = vector.extract_strided_slice %202 {offsets = [0, 192], sizes = [8, 64], strides = [1, 1]} : vector<8x256xf32> to vector<8x64xf32>
    %210 = math.tanh %209 : vector<8x64xf32>
    %211 = vector.extract_strided_slice %208 {offsets = [0, 0], sizes = [8, 64], strides = [1, 1]} : vector<8x192xf32> to vector<8x64xf32>
    %212 = vector.extract_strided_slice %208 {offsets = [0, 64], sizes = [8, 64], strides = [1, 1]} : vector<8x192xf32> to vector<8x64xf32>
    %213 = vector.extract_strided_slice %208 {offsets = [0, 128], sizes = [8, 64], strides = [1, 1]} : vector<8x192xf32> to vector<8x64xf32>
    %214 = arith.mulf %212, %191 : vector<8x64xf32>
    %215 = arith.mulf %211, %210 : vector<8x64xf32>
    %216 = arith.addf %214, %215 : vector<8x64xf32>
    %217 = math.tanh %216 : vector<8x64xf32>
    %218 = arith.mulf %213, %217 : vector<8x64xf32>
    %219 = vector.broadcast %c4_i32 : i32 to vector<8x64xi32>
    %220 = arith.cmpi sge, %219, %30 : vector<8x64xi32>
    %221 = vector.broadcast %c4_i32 : i32 to vector<8x64xi32>
    %222 = arith.cmpi slt, %221, %26 : vector<8x64xi32>
    %223 = arith.andi %220, %222 : vector<8x64xi1>
    %cst_65 = arith.constant 0.000000e+00 : f32
    %224 = vector.broadcast %cst_65 : f32 to vector<8x64xf32>
    %225 = arith.select %223, %218, %224 : vector<8x64xi1>, vector<8x64xf32>
    %226 = arith.index_cast %c4_i32 : i32 to index
    %c0_66 = arith.constant 0 : index
    %c0_67 = arith.constant 0 : index
    %227 = vector.load %arg7[%226, %c0_66, %c0_67] : memref<8x8x64xf32, #tpu.memory_space<vmem>>, vector<1x8x64xf32>
    %228 = vector.shape_cast %227 : vector<1x8x64xf32> to vector<8x64xf32>
    %229 = vector.shape_cast %225 : vector<8x64xf32> to vector<1x8x64xf32>
    tpu.vector_store %arg7[%226, %c0_66, %c0_67], %229 {strides = array<i32>} : memref<8x8x64xf32, #tpu.memory_space<vmem>>, vector<1x8x64xf32>,
    %230 = arith.select %223, %218, %190 : vector<8x64xi1>, vector<8x64xf32>
    %231 = arith.select %223, %216, %191 : vector<8x64xi1>, vector<8x64xf32>
    %c5_i32 = arith.constant 5 : i32
    %c7_i32_68 = arith.constant 7 : i32
    %232 = arith.subi %c7_i32_68, %c5_i32 : i32
    %233 = arith.index_cast %c5_i32 : i32 to index
    %c0_69 = arith.constant 0 : index
    %c0_70 = arith.constant 0 : index
    %234 = vector.load %arg1[%233, %c0_69, %c0_70] : memref<8x8x256xf32, #tpu.memory_space<vmem>>, vector<1x8x256xf32>
    %235 = vector.shape_cast %234 : vector<1x8x256xf32> to vector<8x256xf32>
    %236 = arith.index_cast %232 : i32 to index
    %c0_71 = arith.constant 0 : index
    %c0_72 = arith.constant 0 : index
    %237 = vector.load %arg1[%236, %c0_71, %c0_72] : memref<8x8x256xf32, #tpu.memory_space<vmem>>, vector<1x8x256xf32>
    %238 = vector.shape_cast %237 : vector<1x8x256xf32> to vector<8x256xf32>
    %239 = arith.select %24, %235, %238 : vector<8x256xi1>, vector<8x256xf32>
    %c0_73 = arith.constant 0 : index
    %c0_74 = arith.constant 0 : index
    %240 = vector.load %arg2[%c0_73, %c0_74] : memref<64x256xf32, #tpu.memory_space<vmem>>, vector<64x256xf32>
    %cst_75 = arith.constant dense<0.000000e+00> : vector<8x256xf32>
    %241 = tpu.matmul %230, %240, %cst_75 {dimension_numbers = #tpu.dot_dimension_numbers<[1], [0], [0], [1], [0, 0, 1, 1], [], []>} : vector<8x64xf32>, vector<64x256xf32>, vector<8x256xf32> -> vector<8x256xf32>
    %242 = arith.addf %239, %241 : vector<8x256xf32>
    %243 = vector.extract_strided_slice %242 {offsets = [0, 0], sizes = [8, 192], strides = [1, 1]} : vector<8x256xf32> to vector<8x192xf32>
    %244 = arith.negf %243 : vector<8x192xf32>
    %245 = math.exp %244 : vector<8x192xf32>
    %cst_76 = arith.constant 1.000000e+00 : f32
    %246 = vector.broadcast %cst_76 : f32 to vector<8x192xf32>
    %247 = arith.addf %246, %245 : vector<8x192xf32>
    %248 = arith.divf %246, %247 : vector<8x192xf32>
    %249 = vector.extract_strided_slice %242 {offsets = [0, 192], sizes = [8, 64], strides = [1, 1]} : vector<8x256xf32> to vector<8x64xf32>
    %250 = math.tanh %249 : vector<8x64xf32>
    %251 = vector.extract_strided_slice %248 {offsets = [0, 0], sizes = [8, 64], strides = [1, 1]} : vector<8x192xf32> to vector<8x64xf32>
    %252 = vector.extract_strided_slice %248 {offsets = [0, 64], sizes = [8, 64], strides = [1, 1]} : vector<8x192xf32> to vector<8x64xf32>
    %253 = vector.extract_strided_slice %248 {offsets = [0, 128], sizes = [8, 64], strides = [1, 1]} : vector<8x192xf32> to vector<8x64xf32>
    %254 = arith.mulf %252, %231 : vector<8x64xf32>
    %255 = arith.mulf %251, %250 : vector<8x64xf32>
    %256 = arith.addf %254, %255 : vector<8x64xf32>
    %257 = math.tanh %256 : vector<8x64xf32>
    %258 = arith.mulf %253, %257 : vector<8x64xf32>
    %259 = vector.broadcast %c5_i32 : i32 to vector<8x64xi32>
    %260 = arith.cmpi sge, %259, %30 : vector<8x64xi32>
    %261 = vector.broadcast %c5_i32 : i32 to vector<8x64xi32>
    %262 = arith.cmpi slt, %261, %26 : vector<8x64xi32>
    %263 = arith.andi %260, %262 : vector<8x64xi1>
    %cst_77 = arith.constant 0.000000e+00 : f32
    %264 = vector.broadcast %cst_77 : f32 to vector<8x64xf32>
    %265 = arith.select %263, %258, %264 : vector<8x64xi1>, vector<8x64xf32>
    %266 = arith.index_cast %c5_i32 : i32 to index
    %c0_78 = arith.constant 0 : index
    %c0_79 = arith.constant 0 : index
    %267 = vector.load %arg7[%266, %c0_78, %c0_79] : memref<8x8x64xf32, #tpu.memory_space<vmem>>, vector<1x8x64xf32>
    %268 = vector.shape_cast %267 : vector<1x8x64xf32> to vector<8x64xf32>
    %269 = vector.shape_cast %265 : vector<8x64xf32> to vector<1x8x64xf32>
    tpu.vector_store %arg7[%266, %c0_78, %c0_79], %269 {strides = array<i32>} : memref<8x8x64xf32, #tpu.memory_space<vmem>>, vector<1x8x64xf32>,
    %270 = arith.select %263, %258, %230 : vector<8x64xi1>, vector<8x64xf32>
    %271 = arith.select %263, %256, %231 : vector<8x64xi1>, vector<8x64xf32>
    %c6_i32 = arith.constant 6 : i32
    %c7_i32_80 = arith.constant 7 : i32
    %272 = arith.subi %c7_i32_80, %c6_i32 : i32
    %273 = arith.index_cast %c6_i32 : i32 to index
    %c0_81 = arith.constant 0 : index
    %c0_82 = arith.constant 0 : index
    %274 = vector.load %arg1[%273, %c0_81, %c0_82] : memref<8x8x256xf32, #tpu.memory_space<vmem>>, vector<1x8x256xf32>
    %275 = vector.shape_cast %274 : vector<1x8x256xf32> to vector<8x256xf32>
    %276 = arith.index_cast %272 : i32 to index
    %c0_83 = arith.constant 0 : index
    %c0_84 = arith.constant 0 : index
    %277 = vector.load %arg1[%276, %c0_83, %c0_84] : memref<8x8x256xf32, #tpu.memory_space<vmem>>, vector<1x8x256xf32>
    %278 = vector.shape_cast %277 : vector<1x8x256xf32> to vector<8x256xf32>
    %279 = arith.select %24, %275, %278 : vector<8x256xi1>, vector<8x256xf32>
    %c0_85 = arith.constant 0 : index
    %c0_86 = arith.constant 0 : index
    %280 = vector.load %arg2[%c0_85, %c0_86] : memref<64x256xf32, #tpu.memory_space<vmem>>, vector<64x256xf32>
    %cst_87 = arith.constant dense<0.000000e+00> : vector<8x256xf32>
    %281 = tpu.matmul %270, %280, %cst_87 {dimension_numbers = #tpu.dot_dimension_numbers<[1], [0], [0], [1], [0, 0, 1, 1], [], []>} : vector<8x64xf32>, vector<64x256xf32>, vector<8x256xf32> -> vector<8x256xf32>
    %282 = arith.addf %279, %281 : vector<8x256xf32>
    %283 = vector.extract_strided_slice %282 {offsets = [0, 0], sizes = [8, 192], strides = [1, 1]} : vector<8x256xf32> to vector<8x192xf32>
    %284 = arith.negf %283 : vector<8x192xf32>
    %285 = math.exp %284 : vector<8x192xf32>
    %cst_88 = arith.constant 1.000000e+00 : f32
    %286 = vector.broadcast %cst_88 : f32 to vector<8x192xf32>
    %287 = arith.addf %286, %285 : vector<8x192xf32>
    %288 = arith.divf %286, %287 : vector<8x192xf32>
    %289 = vector.extract_strided_slice %282 {offsets = [0, 192], sizes = [8, 64], strides = [1, 1]} : vector<8x256xf32> to vector<8x64xf32>
    %290 = math.tanh %289 : vector<8x64xf32>
    %291 = vector.extract_strided_slice %288 {offsets = [0, 0], sizes = [8, 64], strides = [1, 1]} : vector<8x192xf32> to vector<8x64xf32>
    %292 = vector.extract_strided_slice %288 {offsets = [0, 64], sizes = [8, 64], strides = [1, 1]} : vector<8x192xf32> to vector<8x64xf32>
    %293 = vector.extract_strided_slice %288 {offsets = [0, 128], sizes = [8, 64], strides = [1, 1]} : vector<8x192xf32> to vector<8x64xf32>
    %294 = arith.mulf %292, %271 : vector<8x64xf32>
    %295 = arith.mulf %291, %290 : vector<8x64xf32>
    %296 = arith.addf %294, %295 : vector<8x64xf32>
    %297 = math.tanh %296 : vector<8x64xf32>
    %298 = arith.mulf %293, %297 : vector<8x64xf32>
    %299 = vector.broadcast %c6_i32 : i32 to vector<8x64xi32>
    %300 = arith.cmpi sge, %299, %30 : vector<8x64xi32>
    %301 = vector.broadcast %c6_i32 : i32 to vector<8x64xi32>
    %302 = arith.cmpi slt, %301, %26 : vector<8x64xi32>
    %303 = arith.andi %300, %302 : vector<8x64xi1>
    %cst_89 = arith.constant 0.000000e+00 : f32
    %304 = vector.broadcast %cst_89 : f32 to vector<8x64xf32>
    %305 = arith.select %303, %298, %304 : vector<8x64xi1>, vector<8x64xf32>
    %306 = arith.index_cast %c6_i32 : i32 to index
    %c0_90 = arith.constant 0 : index
    %c0_91 = arith.constant 0 : index
    %307 = vector.load %arg7[%306, %c0_90, %c0_91] : memref<8x8x64xf32, #tpu.memory_space<vmem>>, vector<1x8x64xf32>
    %308 = vector.shape_cast %307 : vector<1x8x64xf32> to vector<8x64xf32>
    %309 = vector.shape_cast %305 : vector<8x64xf32> to vector<1x8x64xf32>
    tpu.vector_store %arg7[%306, %c0_90, %c0_91], %309 {strides = array<i32>} : memref<8x8x64xf32, #tpu.memory_space<vmem>>, vector<1x8x64xf32>,
    %310 = arith.select %303, %298, %270 : vector<8x64xi1>, vector<8x64xf32>
    %311 = arith.select %303, %296, %271 : vector<8x64xi1>, vector<8x64xf32>
    %c7_i32_92 = arith.constant 7 : i32
    %c7_i32_93 = arith.constant 7 : i32
    %312 = arith.subi %c7_i32_93, %c7_i32_92 : i32
    %313 = arith.index_cast %c7_i32_92 : i32 to index
    %c0_94 = arith.constant 0 : index
    %c0_95 = arith.constant 0 : index
    %314 = vector.load %arg1[%313, %c0_94, %c0_95] : memref<8x8x256xf32, #tpu.memory_space<vmem>>, vector<1x8x256xf32>
    %315 = vector.shape_cast %314 : vector<1x8x256xf32> to vector<8x256xf32>
    %316 = arith.index_cast %312 : i32 to index
    %c0_96 = arith.constant 0 : index
    %c0_97 = arith.constant 0 : index
    %317 = vector.load %arg1[%316, %c0_96, %c0_97] : memref<8x8x256xf32, #tpu.memory_space<vmem>>, vector<1x8x256xf32>
    %318 = vector.shape_cast %317 : vector<1x8x256xf32> to vector<8x256xf32>
    %319 = arith.select %24, %315, %318 : vector<8x256xi1>, vector<8x256xf32>
    %c0_98 = arith.constant 0 : index
    %c0_99 = arith.constant 0 : index
    %320 = vector.load %arg2[%c0_98, %c0_99] : memref<64x256xf32, #tpu.memory_space<vmem>>, vector<64x256xf32>
    %cst_100 = arith.constant dense<0.000000e+00> : vector<8x256xf32>
    %321 = tpu.matmul %310, %320, %cst_100 {dimension_numbers = #tpu.dot_dimension_numbers<[1], [0], [0], [1], [0, 0, 1, 1], [], []>} : vector<8x64xf32>, vector<64x256xf32>, vector<8x256xf32> -> vector<8x256xf32>
    %322 = arith.addf %319, %321 : vector<8x256xf32>
    %323 = vector.extract_strided_slice %322 {offsets = [0, 0], sizes = [8, 192], strides = [1, 1]} : vector<8x256xf32> to vector<8x192xf32>
    %324 = arith.negf %323 : vector<8x192xf32>
    %325 = math.exp %324 : vector<8x192xf32>
    %cst_101 = arith.constant 1.000000e+00 : f32
    %326 = vector.broadcast %cst_101 : f32 to vector<8x192xf32>
    %327 = arith.addf %326, %325 : vector<8x192xf32>
    %328 = arith.divf %326, %327 : vector<8x192xf32>
    %329 = vector.extract_strided_slice %322 {offsets = [0, 192], sizes = [8, 64], strides = [1, 1]} : vector<8x256xf32> to vector<8x64xf32>
    %330 = math.tanh %329 : vector<8x64xf32>
    %331 = vector.extract_strided_slice %328 {offsets = [0, 0], sizes = [8, 64], strides = [1, 1]} : vector<8x192xf32> to vector<8x64xf32>
    %332 = vector.extract_strided_slice %328 {offsets = [0, 64], sizes = [8, 64], strides = [1, 1]} : vector<8x192xf32> to vector<8x64xf32>
    %333 = vector.extract_strided_slice %328 {offsets = [0, 128], sizes = [8, 64], strides = [1, 1]} : vector<8x192xf32> to vector<8x64xf32>
    %334 = arith.mulf %332, %311 : vector<8x64xf32>
    %335 = arith.mulf %331, %330 : vector<8x64xf32>
    %336 = arith.addf %334, %335 : vector<8x64xf32>
    %337 = math.tanh %336 : vector<8x64xf32>
    %338 = arith.mulf %333, %337 : vector<8x64xf32>
    %339 = vector.broadcast %c7_i32_92 : i32 to vector<8x64xi32>
    %340 = arith.cmpi sge, %339, %30 : vector<8x64xi32>
    %341 = vector.broadcast %c7_i32_92 : i32 to vector<8x64xi32>
    %342 = arith.cmpi slt, %341, %26 : vector<8x64xi32>
    %343 = arith.andi %340, %342 : vector<8x64xi1>
    %cst_102 = arith.constant 0.000000e+00 : f32
    %344 = vector.broadcast %cst_102 : f32 to vector<8x64xf32>
    %345 = arith.select %343, %338, %344 : vector<8x64xi1>, vector<8x64xf32>
    %346 = arith.index_cast %c7_i32_92 : i32 to index
    %c0_103 = arith.constant 0 : index
    %c0_104 = arith.constant 0 : index
    %347 = vector.load %arg7[%346, %c0_103, %c0_104] : memref<8x8x64xf32, #tpu.memory_space<vmem>>, vector<1x8x64xf32>
    %348 = vector.shape_cast %347 : vector<1x8x64xf32> to vector<8x64xf32>
    %349 = vector.shape_cast %345 : vector<8x64xf32> to vector<1x8x64xf32>
    tpu.vector_store %arg7[%346, %c0_103, %c0_104], %349 {strides = array<i32>} : memref<8x8x64xf32, #tpu.memory_space<vmem>>, vector<1x8x64xf32>,
    %350 = arith.select %343, %338, %310 : vector<8x64xi1>, vector<8x64xf32>
    %351 = arith.select %343, %336, %311 : vector<8x64xi1>, vector<8x64xf32>
    %c8_i32_105 = arith.constant 8 : i32
    %c0_i32_106 = arith.constant 0 : i32
    %352 = arith.index_cast %c0_i32_106 : i32 to index
    %c0_107 = arith.constant 0 : index
    %c0_108 = arith.constant 0 : index
    %353 = vector.load %arg7[%352, %c0_107, %c0_108] : memref<8x8x64xf32, #tpu.memory_space<vmem>>, vector<1x8x64xf32>
    %354 = vector.shape_cast %353 : vector<1x8x64xf32> to vector<8x64xf32>
    %c7_i32_109 = arith.constant 7 : i32
    %355 = arith.subi %c7_i32_109, %c0_i32_106 : i32
    %356 = arith.index_cast %355 : i32 to index
    %c0_110 = arith.constant 0 : index
    %c0_111 = arith.constant 0 : index
    %357 = vector.load %arg7[%356, %c0_110, %c0_111] : memref<8x8x64xf32, #tpu.memory_space<vmem>>, vector<1x8x64xf32>
    %358 = vector.shape_cast %357 : vector<1x8x64xf32> to vector<8x64xf32>
    %359 = vector.extract_strided_slice %354 {offsets = [0, 0], sizes = [8, 32], strides = [1, 1]} : vector<8x64xf32> to vector<8x32xf32>
    %360 = vector.extract_strided_slice %358 {offsets = [0, 32], sizes = [8, 32], strides = [1, 1]} : vector<8x64xf32> to vector<8x32xf32>
    %361 = arith.addf %359, %360 : vector<8x32xf32>
    %362 = arith.index_cast %c0_i32_106 : i32 to index
    %c0_112 = arith.constant 0 : index
    %c0_113 = arith.constant 0 : index
    %363 = vector.load %arg4[%362, %c0_112, %c0_113] : memref<8x8x32xf32, #tpu.memory_space<vmem>>, vector<1x8x32xf32>
    %364 = vector.shape_cast %363 : vector<1x8x32xf32> to vector<8x32xf32>
    %365 = vector.shape_cast %361 : vector<8x32xf32> to vector<1x8x32xf32>
    tpu.vector_store %arg4[%362, %c0_112, %c0_113], %365 {strides = array<i32>} : memref<8x8x32xf32, #tpu.memory_space<vmem>>, vector<1x8x32xf32>,
    %c1_i32_114 = arith.constant 1 : i32
    %366 = arith.index_cast %c1_i32_114 : i32 to index
    %c0_115 = arith.constant 0 : index
    %c0_116 = arith.constant 0 : index
    %367 = vector.load %arg7[%366, %c0_115, %c0_116] : memref<8x8x64xf32, #tpu.memory_space<vmem>>, vector<1x8x64xf32>
    %368 = vector.shape_cast %367 : vector<1x8x64xf32> to vector<8x64xf32>
    %c7_i32_117 = arith.constant 7 : i32
    %369 = arith.subi %c7_i32_117, %c1_i32_114 : i32
    %370 = arith.index_cast %369 : i32 to index
    %c0_118 = arith.constant 0 : index
    %c0_119 = arith.constant 0 : index
    %371 = vector.load %arg7[%370, %c0_118, %c0_119] : memref<8x8x64xf32, #tpu.memory_space<vmem>>, vector<1x8x64xf32>
    %372 = vector.shape_cast %371 : vector<1x8x64xf32> to vector<8x64xf32>
    %373 = vector.extract_strided_slice %368 {offsets = [0, 0], sizes = [8, 32], strides = [1, 1]} : vector<8x64xf32> to vector<8x32xf32>
    %374 = vector.extract_strided_slice %372 {offsets = [0, 32], sizes = [8, 32], strides = [1, 1]} : vector<8x64xf32> to vector<8x32xf32>
    %375 = arith.addf %373, %374 : vector<8x32xf32>
    %376 = arith.index_cast %c1_i32_114 : i32 to index
    %c0_120 = arith.constant 0 : index
    %c0_121 = arith.constant 0 : index
    %377 = vector.load %arg4[%376, %c0_120, %c0_121] : memref<8x8x32xf32, #tpu.memory_space<vmem>>, vector<1x8x32xf32>
    %378 = vector.shape_cast %377 : vector<1x8x32xf32> to vector<8x32xf32>
    %379 = vector.shape_cast %375 : vector<8x32xf32> to vector<1x8x32xf32>
    tpu.vector_store %arg4[%376, %c0_120, %c0_121], %379 {strides = array<i32>} : memref<8x8x32xf32, #tpu.memory_space<vmem>>, vector<1x8x32xf32>,
    %c2_i32_122 = arith.constant 2 : i32
    %380 = arith.index_cast %c2_i32_122 : i32 to index
    %c0_123 = arith.constant 0 : index
    %c0_124 = arith.constant 0 : index
    %381 = vector.load %arg7[%380, %c0_123, %c0_124] : memref<8x8x64xf32, #tpu.memory_space<vmem>>, vector<1x8x64xf32>
    %382 = vector.shape_cast %381 : vector<1x8x64xf32> to vector<8x64xf32>
    %c7_i32_125 = arith.constant 7 : i32
    %383 = arith.subi %c7_i32_125, %c2_i32_122 : i32
    %384 = arith.index_cast %383 : i32 to index
    %c0_126 = arith.constant 0 : index
    %c0_127 = arith.constant 0 : index
    %385 = vector.load %arg7[%384, %c0_126, %c0_127] : memref<8x8x64xf32, #tpu.memory_space<vmem>>, vector<1x8x64xf32>
    %386 = vector.shape_cast %385 : vector<1x8x64xf32> to vector<8x64xf32>
    %387 = vector.extract_strided_slice %382 {offsets = [0, 0], sizes = [8, 32], strides = [1, 1]} : vector<8x64xf32> to vector<8x32xf32>
    %388 = vector.extract_strided_slice %386 {offsets = [0, 32], sizes = [8, 32], strides = [1, 1]} : vector<8x64xf32> to vector<8x32xf32>
    %389 = arith.addf %387, %388 : vector<8x32xf32>
    %390 = arith.index_cast %c2_i32_122 : i32 to index
    %c0_128 = arith.constant 0 : index
    %c0_129 = arith.constant 0 : index
    %391 = vector.load %arg4[%390, %c0_128, %c0_129] : memref<8x8x32xf32, #tpu.memory_space<vmem>>, vector<1x8x32xf32>
    %392 = vector.shape_cast %391 : vector<1x8x32xf32> to vector<8x32xf32>
    %393 = vector.shape_cast %389 : vector<8x32xf32> to vector<1x8x32xf32>
    tpu.vector_store %arg4[%390, %c0_128, %c0_129], %393 {strides = array<i32>} : memref<8x8x32xf32, #tpu.memory_space<vmem>>, vector<1x8x32xf32>,
    %c3_i32_130 = arith.constant 3 : i32
    %394 = arith.index_cast %c3_i32_130 : i32 to index
    %c0_131 = arith.constant 0 : index
    %c0_132 = arith.constant 0 : index
    %395 = vector.load %arg7[%394, %c0_131, %c0_132] : memref<8x8x64xf32, #tpu.memory_space<vmem>>, vector<1x8x64xf32>
    %396 = vector.shape_cast %395 : vector<1x8x64xf32> to vector<8x64xf32>
    %c7_i32_133 = arith.constant 7 : i32
    %397 = arith.subi %c7_i32_133, %c3_i32_130 : i32
    %398 = arith.index_cast %397 : i32 to index
    %c0_134 = arith.constant 0 : index
    %c0_135 = arith.constant 0 : index
    %399 = vector.load %arg7[%398, %c0_134, %c0_135] : memref<8x8x64xf32, #tpu.memory_space<vmem>>, vector<1x8x64xf32>
    %400 = vector.shape_cast %399 : vector<1x8x64xf32> to vector<8x64xf32>
    %401 = vector.extract_strided_slice %396 {offsets = [0, 0], sizes = [8, 32], strides = [1, 1]} : vector<8x64xf32> to vector<8x32xf32>
    %402 = vector.extract_strided_slice %400 {offsets = [0, 32], sizes = [8, 32], strides = [1, 1]} : vector<8x64xf32> to vector<8x32xf32>
    %403 = arith.addf %401, %402 : vector<8x32xf32>
    %404 = arith.index_cast %c3_i32_130 : i32 to index
    %c0_136 = arith.constant 0 : index
    %c0_137 = arith.constant 0 : index
    %405 = vector.load %arg4[%404, %c0_136, %c0_137] : memref<8x8x32xf32, #tpu.memory_space<vmem>>, vector<1x8x32xf32>
    %406 = vector.shape_cast %405 : vector<1x8x32xf32> to vector<8x32xf32>
    %407 = vector.shape_cast %403 : vector<8x32xf32> to vector<1x8x32xf32>
    tpu.vector_store %arg4[%404, %c0_136, %c0_137], %407 {strides = array<i32>} : memref<8x8x32xf32, #tpu.memory_space<vmem>>, vector<1x8x32xf32>,
    %c4_i32_138 = arith.constant 4 : i32
    %408 = arith.index_cast %c4_i32_138 : i32 to index
    %c0_139 = arith.constant 0 : index
    %c0_140 = arith.constant 0 : index
    %409 = vector.load %arg7[%408, %c0_139, %c0_140] : memref<8x8x64xf32, #tpu.memory_space<vmem>>, vector<1x8x64xf32>
    %410 = vector.shape_cast %409 : vector<1x8x64xf32> to vector<8x64xf32>
    %c7_i32_141 = arith.constant 7 : i32
    %411 = arith.subi %c7_i32_141, %c4_i32_138 : i32
    %412 = arith.index_cast %411 : i32 to index
    %c0_142 = arith.constant 0 : index
    %c0_143 = arith.constant 0 : index
    %413 = vector.load %arg7[%412, %c0_142, %c0_143] : memref<8x8x64xf32, #tpu.memory_space<vmem>>, vector<1x8x64xf32>
    %414 = vector.shape_cast %413 : vector<1x8x64xf32> to vector<8x64xf32>
    %415 = vector.extract_strided_slice %410 {offsets = [0, 0], sizes = [8, 32], strides = [1, 1]} : vector<8x64xf32> to vector<8x32xf32>
    %416 = vector.extract_strided_slice %414 {offsets = [0, 32], sizes = [8, 32], strides = [1, 1]} : vector<8x64xf32> to vector<8x32xf32>
    %417 = arith.addf %415, %416 : vector<8x32xf32>
    %418 = arith.index_cast %c4_i32_138 : i32 to index
    %c0_144 = arith.constant 0 : index
    %c0_145 = arith.constant 0 : index
    %419 = vector.load %arg4[%418, %c0_144, %c0_145] : memref<8x8x32xf32, #tpu.memory_space<vmem>>, vector<1x8x32xf32>
    %420 = vector.shape_cast %419 : vector<1x8x32xf32> to vector<8x32xf32>
    %421 = vector.shape_cast %417 : vector<8x32xf32> to vector<1x8x32xf32>
    tpu.vector_store %arg4[%418, %c0_144, %c0_145], %421 {strides = array<i32>} : memref<8x8x32xf32, #tpu.memory_space<vmem>>, vector<1x8x32xf32>,
    %c5_i32_146 = arith.constant 5 : i32
    %422 = arith.index_cast %c5_i32_146 : i32 to index
    %c0_147 = arith.constant 0 : index
    %c0_148 = arith.constant 0 : index
    %423 = vector.load %arg7[%422, %c0_147, %c0_148] : memref<8x8x64xf32, #tpu.memory_space<vmem>>, vector<1x8x64xf32>
    %424 = vector.shape_cast %423 : vector<1x8x64xf32> to vector<8x64xf32>
    %c7_i32_149 = arith.constant 7 : i32
    %425 = arith.subi %c7_i32_149, %c5_i32_146 : i32
    %426 = arith.index_cast %425 : i32 to index
    %c0_150 = arith.constant 0 : index
    %c0_151 = arith.constant 0 : index
    %427 = vector.load %arg7[%426, %c0_150, %c0_151] : memref<8x8x64xf32, #tpu.memory_space<vmem>>, vector<1x8x64xf32>
    %428 = vector.shape_cast %427 : vector<1x8x64xf32> to vector<8x64xf32>
    %429 = vector.extract_strided_slice %424 {offsets = [0, 0], sizes = [8, 32], strides = [1, 1]} : vector<8x64xf32> to vector<8x32xf32>
    %430 = vector.extract_strided_slice %428 {offsets = [0, 32], sizes = [8, 32], strides = [1, 1]} : vector<8x64xf32> to vector<8x32xf32>
    %431 = arith.addf %429, %430 : vector<8x32xf32>
    %432 = arith.index_cast %c5_i32_146 : i32 to index
    %c0_152 = arith.constant 0 : index
    %c0_153 = arith.constant 0 : index
    %433 = vector.load %arg4[%432, %c0_152, %c0_153] : memref<8x8x32xf32, #tpu.memory_space<vmem>>, vector<1x8x32xf32>
    %434 = vector.shape_cast %433 : vector<1x8x32xf32> to vector<8x32xf32>
    %435 = vector.shape_cast %431 : vector<8x32xf32> to vector<1x8x32xf32>
    tpu.vector_store %arg4[%432, %c0_152, %c0_153], %435 {strides = array<i32>} : memref<8x8x32xf32, #tpu.memory_space<vmem>>, vector<1x8x32xf32>,
    %c6_i32_154 = arith.constant 6 : i32
    %436 = arith.index_cast %c6_i32_154 : i32 to index
    %c0_155 = arith.constant 0 : index
    %c0_156 = arith.constant 0 : index
    %437 = vector.load %arg7[%436, %c0_155, %c0_156] : memref<8x8x64xf32, #tpu.memory_space<vmem>>, vector<1x8x64xf32>
    %438 = vector.shape_cast %437 : vector<1x8x64xf32> to vector<8x64xf32>
    %c7_i32_157 = arith.constant 7 : i32
    %439 = arith.subi %c7_i32_157, %c6_i32_154 : i32
    %440 = arith.index_cast %439 : i32 to index
    %c0_158 = arith.constant 0 : index
    %c0_159 = arith.constant 0 : index
    %441 = vector.load %arg7[%440, %c0_158, %c0_159] : memref<8x8x64xf32, #tpu.memory_space<vmem>>, vector<1x8x64xf32>
    %442 = vector.shape_cast %441 : vector<1x8x64xf32> to vector<8x64xf32>
    %443 = vector.extract_strided_slice %438 {offsets = [0, 0], sizes = [8, 32], strides = [1, 1]} : vector<8x64xf32> to vector<8x32xf32>
    %444 = vector.extract_strided_slice %442 {offsets = [0, 32], sizes = [8, 32], strides = [1, 1]} : vector<8x64xf32> to vector<8x32xf32>
    %445 = arith.addf %443, %444 : vector<8x32xf32>
    %446 = arith.index_cast %c6_i32_154 : i32 to index
    %c0_160 = arith.constant 0 : index
    %c0_161 = arith.constant 0 : index
    %447 = vector.load %arg4[%446, %c0_160, %c0_161] : memref<8x8x32xf32, #tpu.memory_space<vmem>>, vector<1x8x32xf32>
    %448 = vector.shape_cast %447 : vector<1x8x32xf32> to vector<8x32xf32>
    %449 = vector.shape_cast %445 : vector<8x32xf32> to vector<1x8x32xf32>
    tpu.vector_store %arg4[%446, %c0_160, %c0_161], %449 {strides = array<i32>} : memref<8x8x32xf32, #tpu.memory_space<vmem>>, vector<1x8x32xf32>,
    %c7_i32_162 = arith.constant 7 : i32
    %450 = arith.index_cast %c7_i32_162 : i32 to index
    %c0_163 = arith.constant 0 : index
    %c0_164 = arith.constant 0 : index
    %451 = vector.load %arg7[%450, %c0_163, %c0_164] : memref<8x8x64xf32, #tpu.memory_space<vmem>>, vector<1x8x64xf32>
    %452 = vector.shape_cast %451 : vector<1x8x64xf32> to vector<8x64xf32>
    %c7_i32_165 = arith.constant 7 : i32
    %453 = arith.subi %c7_i32_165, %c7_i32_162 : i32
    %454 = arith.index_cast %453 : i32 to index
    %c0_166 = arith.constant 0 : index
    %c0_167 = arith.constant 0 : index
    %455 = vector.load %arg7[%454, %c0_166, %c0_167] : memref<8x8x64xf32, #tpu.memory_space<vmem>>, vector<1x8x64xf32>
    %456 = vector.shape_cast %455 : vector<1x8x64xf32> to vector<8x64xf32>
    %457 = vector.extract_strided_slice %452 {offsets = [0, 0], sizes = [8, 32], strides = [1, 1]} : vector<8x64xf32> to vector<8x32xf32>
    %458 = vector.extract_strided_slice %456 {offsets = [0, 32], sizes = [8, 32], strides = [1, 1]} : vector<8x64xf32> to vector<8x32xf32>
    %459 = arith.addf %457, %458 : vector<8x32xf32>
    %460 = arith.index_cast %c7_i32_162 : i32 to index
    %c0_168 = arith.constant 0 : index
    %c0_169 = arith.constant 0 : index
    %461 = vector.load %arg4[%460, %c0_168, %c0_169] : memref<8x8x32xf32, #tpu.memory_space<vmem>>, vector<1x8x32xf32>
    %462 = vector.shape_cast %461 : vector<1x8x32xf32> to vector<8x32xf32>
    %463 = vector.shape_cast %459 : vector<8x32xf32> to vector<1x8x32xf32>
    tpu.vector_store %arg4[%460, %c0_168, %c0_169], %463 {strides = array<i32>} : memref<8x8x32xf32, #tpu.memory_space<vmem>>, vector<1x8x32xf32>,
    %c8_i32_170 = arith.constant 8 : i32
    %464 = vector.extract_strided_slice %350 {offsets = [0, 0], sizes = [8, 32], strides = [1, 1]} : vector<8x64xf32> to vector<8x32xf32>
    %c0_171 = arith.constant 0 : index
    %c0_172 = arith.constant 0 : index
    %465 = vector.load %arg5[%c0_171, %c0_172] : memref<8x32xf32, #tpu.memory_space<vmem>>, vector<8x32xf32>
    tpu.vector_store %arg5[%c0_171, %c0_172], %464 {strides = array<i32>} : memref<8x32xf32, #tpu.memory_space<vmem>>, vector<8x32xf32>,
    %466 = vector.extract_strided_slice %351 {offsets = [0, 0], sizes = [8, 32], strides = [1, 1]} : vector<8x64xf32> to vector<8x32xf32>
    %c0_173 = arith.constant 0 : index
    %c0_174 = arith.constant 0 : index
    %467 = vector.load %arg6[%c0_173, %c0_174] : memref<8x32xf32, #tpu.memory_space<vmem>>, vector<8x32xf32>
    tpu.vector_store %arg6[%c0_173, %c0_174], %466 {strides = array<i32>} : memref<8x32xf32, #tpu.memory_space<vmem>>, vector<8x32xf32>,
    return
  }
  func.func @transform_0(%arg0: i32) -> (i32, i32, i32) {
    %c0_i32 = arith.constant 0 : i32
    %c0_i32_0 = arith.constant 0 : i32
    %c0_i32_1 = arith.constant 0 : i32
    return %c0_i32, %arg0, %c0_i32_0 : i32, i32, i32
  }
  func.func @transform_1(%arg0: i32) -> (i32, i32) {
    %c0_i32 = arith.constant 0 : i32
    %c0_i32_0 = arith.constant 0 : i32
    %c0_i32_1 = arith.constant 0 : i32
    return %c0_i32, %c0_i32_0 : i32, i32
  }
  func.func @transform_2(%arg0: i32) -> (i32, i32) {
    %c0_i32 = arith.constant 0 : i32
    %c0_i32_0 = arith.constant 0 : i32
    return %arg0, %c0_i32 : i32, i32
  }
  func.func @transform_3(%arg0: i32) -> (i32, i32, i32) {
    %c0_i32 = arith.constant 0 : i32
    %c0_i32_0 = arith.constant 0 : i32
    %c0_i32_1 = arith.constant 0 : i32
    return %c0_i32, %arg0, %c0_i32_0 : i32, i32, i32
  }
  func.func @transform_4(%arg0: i32) -> (i32, i32) {
    %c0_i32 = arith.constant 0 : i32
    %c0_i32_0 = arith.constant 0 : i32
    return %arg0, %c0_i32 : i32, i32
  }
  func.func @transform_5(%arg0: i32) -> (i32, i32) {
    %c0_i32 = arith.constant 0 : i32
    %c0_i32_0 = arith.constant 0 : i32
    return %arg0, %c0_i32 : i32, i32
  }
}

</mosaic_0001>

<llo_original>
// kernel: tpu_custom_call.1
$region0: #{tpu_custom_call.1}
  #allocation0 [shape = 'u32[]', space=smem, size = 0x4, offset = 0x4, fixed_abs, tag = 'smem constant byte address 0x4 - core index']
  #allocation1 [shape = 'u32[144,128]{1,0:T(1,128)}', space=vmem, size = 0x12000, scoped, tag = 'internal scratch']
  #allocation2 [shape = 'f32[8,8,64]{2,1,0:T(8,128)}', space=vmem, size = 0x8000, scoped, tag = 'scratch operand']
  %s0 = inlined_call_operand.hbm [shape: f32[8,8,256], index: 0, kind: input, shape index: {}]
  %s1 = inlined_call_operand.hbm [shape: f32[64,256], index: 1, kind: input, shape index: {}]
  %s2 = inlined_call_operand.vmem [shape: s32[8,1], index: 2, kind: input, shape index: {}]
  %s3 = inlined_call_operand.hbm [shape: f32[8,8,32], index: 3, kind: output, shape index: {0}]
  %s4 = inlined_call_operand.hbm [shape: f32[8,32], index: 4, kind: output, shape index: {1}]
  %s5 = inlined_call_operand.hbm [shape: f32[8,32], index: 5, kind: output, shape index: {2}]
  %6 = xla_tuple %s3, %s4, %s5
  %s7 = sld [smem:[#allocation0]]
  $region46: #{tpu_custom_call.1} parent=0
    _
  %s9 = ssub.s32 1, %s7
  %s10 = scalar_select 0, %s9, %s7
  $region1: #{tpu_custom_call.1} parent=0
    #allocation3 [shape = 'u8[65536]{0}', space=vmem, size = 0x10000, scoped, tag = 'input window, operand 0, single buffered']
    #allocation4 [shape = 's32[1]{0}', space=sflag, size = 0x4, scoped, tag = 'scoped memory for tpu_custom_call.1']
    #allocation5 [shape = 's32[1]{0}', space=sflag, size = 0x4, scoped, tag = 'scoped memory for tpu_custom_call.1']
    #allocation6 [shape = 'u8[65536]{0}', space=vmem, size = 0x10000, scoped, tag = 'input window, operand 1, single buffered']
    #allocation7 [shape = 's32[1]{0}', space=sflag, size = 0x4, scoped, tag = 'scoped memory for tpu_custom_call.1']
    #allocation8 [shape = 'u8[32768]{0}', space=vmem, size = 0x8000, scoped, tag = 'output window, operand 0, single buffered']
    #allocation9 [shape = 'u8[4096]{0}', space=vmem, size = 0x1000, scoped, tag = 'output window, operand 1, single buffered']
    #allocation10 [shape = 's32[1]{0}', space=sflag, size = 0x4, scoped, tag = 'scoped memory for tpu_custom_call.1']
    #allocation11 [shape = 'u8[4096]{0}', space=vmem, size = 0x1000, scoped, tag = 'output window, operand 2, single buffered']
    %11 = vsyncpa [#allocation4], 0
    %12 = vsyncpa [#allocation7], 0
    %13 = vsyncpa [#allocation5], 0
    %14 = vsyncpa [#allocation10], 0
    // Predicated region
    $region2: #{tpu_custom_call.1} parent=1 // pred_check
      _
    $region3: #{tpu_custom_call.1} parent=1 // pred_check_branch
      %16 = sbr.rel (0) target = $region5
    $region4: #{tpu_custom_call.1} parent=1 // pred_region
      %s18 = ssub.s32 2048, 2048
      %19 = vsyncadd [#allocation4], %s18
      %s20 = sshll.u32 [#allocation3], 4
      %s21 = int_to_ptr.vmem [resolvable:$true] %s20
      %26 = dma.hbm_to_vmem [thread:$0]  %s0, 2048, %s21, [#allocation4], 256, 256, 16
    $region5: #{tpu_custom_call.1} parent=1 // pred_fallthru
      _
    // Predicated region
    $region6: #{tpu_custom_call.1} parent=1 // pred_check
      _
    $region7: #{tpu_custom_call.1} parent=1 // pred_check_branch
      %28 = sbr.rel (0) target = $region9
    $region8: #{tpu_custom_call.1} parent=1 // pred_region
      %s30 = ssub.s32 2048, 2048
      %31 = vsyncadd [#allocation7], %s30
      %s32 = sshll.u32 [#allocation6], 4
      %s33 = int_to_ptr.vmem [resolvable:$true] %s32
      %38 = dma.hbm_to_vmem [thread:$0]  %s1, 2048, %s33, [#allocation7], 256, 256, 16
    $region9: #{tpu_custom_call.1} parent=1 // pred_fallthru
      _
    // Predicated region
    $region10: #{tpu_custom_call.1} parent=1 // pred_check
      _
    $region11: #{tpu_custom_call.1} parent=1 // pred_check_branch
      %40 = sbr.rel (0) target = $region13
    $region12: #{tpu_custom_call.1} parent=1 // pred_region
      _
    $region13: #{tpu_custom_call.1} parent=1 // pred_fallthru
      _
    // Predicated region
    $region14: #{tpu_custom_call.1} parent=1 // pred_check
      _
    $region15: #{tpu_custom_call.1} parent=1 // pred_check_branch
      %42 = sbr.rel (0) target = $region17
    $region16: #{tpu_custom_call.1} parent=1 // pred_region
      %43 = dma.done [#allocation4], 2048
    $region17: #{tpu_custom_call.1} parent=1 // pred_fallthru
      _
    // Predicated region
    $region18: #{tpu_custom_call.1} parent=1 // pred_check
      _
    $region19: #{tpu_custom_call.1} parent=1 // pred_check_branch
      %45 = sbr.rel (0) target = $region21
    $region20: #{tpu_custom_call.1} parent=1 // pred_region
      %46 = dma.done [#allocation7], 2048
    $region21: #{tpu_custom_call.1} parent=1 // pred_fallthru
      _
    %v47 = vld [vmem:[%s2] sm:$0xff]
    %48 = vset.pattern.permute.xlu0 0
    %49 = vperm.xlu0 %48, %v47
    %v50 = vpop.permute.xlu0 %49
    %v51 = vlaneseq
    %v52 = vand.u32 %v51, 127
    %vm53 = vcmp.lt.s32.totalorder %v52, 32
    %v54 = vadd.s32 %v52, 128
    %vm55 = vcmp.lt.s32.totalorder %v52, 0
    %v56 = vsub.s32 0, %v52
    %v57 = vsel %vm55, %v56, %v52
    %v58 = vshrl.u32 %v57, 6
    %v59 = vand.u32 %v57, 63
    %v60 = vsub.s32 0, %v59
    %v61 = vsel %vm55, %v60, %v59
    %vm62 = vcmp.lt.s32.totalorder %v54, 0
    %v63 = vsub.s32 0, %v54
    %v64 = vsel %vm62, %v63, %v54
    %v65 = vshrl.u32 %v64, 6
    %v66 = vand.u32 %v64, 63
    %v67 = vsub.s32 0, %v66
    %v68 = vsel %vm62, %v67, %v66
    %vm69 = vcmp.ne.s32.totalorder %v61, 0
    %vm70 = vcmp.ne.s32.totalorder %v68, 0
    %vm71 = vcmp.lt.s32.totalorder %v61, 0
    %vm72 = vcmp.lt.s32.totalorder %v68, 0
    %vm73 = vmand %vm71, %vm69
    %vm74 = vmand %vm72, %vm70
    %v75 = vadd.s32 %v61, 64
    %v76 = vadd.s32 %v68, 64
    %v77 = vsel %vm73, %v75, %v61
    %v78 = vsel %vm74, %v76, %v68
    %vm79 = vcmp.lt.s32.totalorder %v77, 32
    %vm80 = vcmp.lt.s32.totalorder %v78, 32
    %v81 = vsel %vm53, %v50, 8
    %v82 = vsub.s32 8, %v50
    %v83 = vsel %vm53, 0, %v82
    %v84 = vld [vmem:[#allocation3] sm:$0xff]
    %v85 = vld [vmem:[#allocation3 + $0x8] sm:$0xff]
    %s86 = scalar_lea.vmem [#allocation3], 112
    %v87 = vld [vmem:[%s86] sm:$0xff]
    %v88 = vld [vmem:[%s86 + $0x8] sm:$0xff]
    %v89 = vsel %vm79, %v84, %v87
    %v90 = vsel %vm80, %v85, %v88
    %v91 = vld [vmem:[#allocation6] sm:$0xff]
    %v92 = vld [vmem:[#allocation6 + $0x8] sm:$0xff]
    %v93 = vld [vmem:[#allocation6 + $0x10] sm:$0xff]
    %v94 = vld [vmem:[#allocation6 + $0x18] sm:$0xff]
    %v95 = vld [vmem:[#allocation6 + $0x20] sm:$0xff]
    %v96 = vld [vmem:[#allocation6 + $0x28] sm:$0xff]
    %v97 = vld [vmem:[#allocation6 + $0x30] sm:$0xff]
    %v98 = vld [vmem:[#allocation6 + $0x38] sm:$0xff]
    %v99 = vld [vmem:[#allocation6 + $0x40] sm:$0xff]
    %v100 = vld [vmem:[#allocation6 + $0x48] sm:$0xff]
    %v101 = vld [vmem:[#allocation6 + $0x50] sm:$0xff]
    %v102 = vld [vmem:[#allocation6 + $0x58] sm:$0xff]
    %v103 = vld [vmem:[#allocation6 + $0x60] sm:$0xff]
    %v104 = vld [vmem:[#allocation6 + $0x68] sm:$0xff]
    %v105 = vld [vmem:[#allocation6 + $0x70] sm:$0xff]
    %v106 = vld [vmem:[#allocation6 + $0x78] sm:$0xff]
    %vm107 = vcmask 523264
    %v109 = vsel %vm107, 0.0, 0
    %111 = vmatprep.subr.mxu0 %v92
    %112 = vmatpush1.msra.mxu0 %v91
    %113 = vmatprep.subr.mxu0 %v94
    %114 = vmatpush1.msra.mxu0 %v93
    %115 = vmatprep.subr.mxu0 %v96
    %116 = vmatpush1.msra.mxu0 %v95
    %117 = vmatprep.subr.mxu0 %v98
    %118 = vmatpush1.msra.mxu0 %v97
    %119 = vmatprep.subr.mxu0 %v100
    %120 = vmatpush1.msra.mxu0 %v99
    %121 = vmatprep.subr.mxu0 %v102
    %122 = vmatpush1.msra.mxu0 %v101
    %123 = vmatprep.subr.mxu0 %v104
    %124 = vmatpush1.msra.mxu0 %v103
    %125 = vmatprep.subr.mxu0 %v106
    %126 = vmatpush1.msra.mxu0 %v105
    %127 = vmatprep.subr.mxu0 0.0
    %128 = vmatpush1.msra.mxu0 0.0
    %129 = vmatprep.subr.mxu0 0.0
    %130 = vmatpush1.msra.mxu0 0.0
    %131 = vmatprep.subr.mxu0 0.0
    %132 = vmatpush1.msra.mxu0 0.0
    %133 = vmatprep.subr.mxu0 0.0
    %134 = vmatpush1.msra.mxu0 0.0
    %135 = vmatprep.subr.mxu0 0.0
    %136 = vmatpush1.msra.mxu0 0.0
    %137 = vmatprep.subr.mxu0 0.0
    %138 = vmatpush1.msra.mxu0 0.0
    %139 = vmatprep.subr.mxu0 0.0
    %140 = vmatpush1.msra.mxu0 0.0
    %141 = vmatprep.subr.mxu0 0.0
    %142 = vmatpush1.msra.mxu0 0.0
    %143 = vmatprep.subr.mxu0 0.0
    %144 = vmatpush1.msra.mxu0 0.0
    %145 = vmatprep.subr.mxu0 0.0
    %146 = vmatpush1.msra.mxu0 0.0
    %147 = vmatprep.subr.mxu0 0.0
    %148 = vmatpush1.msra.mxu0 0.0
    %149 = vmatprep.subr.mxu0 0.0
    %150 = vmatpush1.msra.mxu0 0.0
    %151 = vmatprep.subr.mxu0 0.0
    %152 = vmatpush1.msra.mxu0 0.0
    %153 = vmatprep.subr.mxu0 0.0
    %154 = vmatpush1.msra.mxu0 0.0
    %155 = vmatprep.subr.mxu0 0.0
    %156 = vmatpush1.msra.mxu0 0.0
    %157 = vmatprep.subr.mxu0 0.0
    %158 = vmatpush1.msra.mxu0 0.0
    %159 = vmatprep.subr.mxu0 0.0
    %160 = vmatpush1.msra.mxu0 0.0
    %161 = vmatprep.subr.mxu0 0.0
    %162 = vmatpush1.msra.mxu0 0.0
    %163 = vmatprep.subr.mxu0 0.0
    %164 = vmatpush1.msra.mxu0 0.0
    %165 = vmatprep.subr.mxu0 0.0
    %166 = vmatpush1.msra.mxu0 0.0
    %167 = vmatprep.subr.mxu0 0.0
    %168 = vmatpush1.msra.mxu0 0.0
    %169 = vmatprep.subr.mxu0 0.0
    %170 = vmatpush1.msra.mxu0 0.0
    %171 = vmatprep.subr.mxu0 0.0
    %172 = vmatpush1.msra.mxu0 0.0
    %173 = vmatprep.subr.mxu0 0.0
    %174 = vmatpush1.msra.mxu0 0.0
    %175 = vmatprep.mubr.f32.mxu0 0.0
    %176 = vmatmul.mubr.f32.gmra.mrb[0].mxu0 %v109
    %v177 = vpop.f32.mrb[0].mxu0
    %v178 = vadd.f32 0.0, %v177
    %v179 = vpop.f32.mrb[0].mxu0
    %v180 = vadd.f32 0.0, %v179
    %181 = vdwg.mxu0
    %v182 = vadd.f32 %v89, %v178
    %v183 = vadd.f32 %v90, %v180
    %v184 = vxor.u32 %v182, 2147483648
    %v185 = vxor.u32 %v183, 2147483648
    %v186 = vmul.f32 %v184, 1.442695
    %v187 = vpow.pop %v186
    %v188 = vmul.f32 %v185, 1.442695
    %v189 = vpow.pop %v188
    %v190 = vadd.f32 %v187, 1.0
    %v191 = vadd.f32 %v189, 1.0
    %v192 = vrcp.pop %v190
    %v193 = vmul.f32 1.0, %v192
    %v194 = vrcp.pop %v191
    %v195 = vmul.f32 1.0, %v194
    %v196 = vtanh.pop %v183
    %v197 = vmul.f32 %v193, 0.0
    %199 = vrot.lane.b32.xlu0 %v196, 64
    %v200 = vpop.permute.xlu0 %199
    %v202 = vmul.f32 %v193, %v200
    %204 = vrot.lane.b32.xlu0 %v202, 64
    %v205 = vpop.permute.xlu0 %204
    %v207 = vadd.f32 %v197, %v205
    %v208 = vtanh.pop %v207
    %210 = vrot.lane.b32.xlu0 %v208, 64
    %v211 = vpop.permute.xlu0 %210
    %v213 = vmul.f32 %v195, %v211
    %vm214 = vcmp.le.s32.totalorder %v83, 0
    %vm215 = vcmp.gt.s32.totalorder %v81, 0
    %vm216 = vmand %vm214, %vm215
    %v217 = vsel %vm216, %v213, 0.0
    %218 = vst.msk [vmem:[#allocation2] sm:$0xff] %vm107, %v217
    %220 = vrot.lane.b32.xlu0 %v207, 64
    %v221 = vpop.permute.xlu0 %220
    %v223 = vsel %vm216, %v221, 0.0
    %s224 = scalar_lea.vmem [#allocation3], 16
    %v225 = vld [vmem:[%s224] sm:$0xff]
    %v226 = vld [vmem:[%s224 + $0x8] sm:$0xff]
    %s227 = scalar_lea.vmem [#allocation3], 96
    %v228 = vld [vmem:[%s227] sm:$0xff]
    %v229 = vld [vmem:[%s227 + $0x8] sm:$0xff]
    %v230 = vsel %vm79, %v225, %v228
    %v231 = vsel %vm80, %v226, %v229
    %v232 = vld [vmem:[#allocation6] sm:$0xff]
    %v233 = vld [vmem:[#allocation6 + $0x8] sm:$0xff]
    %v234 = vld [vmem:[#allocation6 + $0x10] sm:$0xff]
    %v235 = vld [vmem:[#allocation6 + $0x18] sm:$0xff]
    %v236 = vld [vmem:[#allocation6 + $0x20] sm:$0xff]
    %v237 = vld [vmem:[#allocation6 + $0x28] sm:$0xff]
    %v238 = vld [vmem:[#allocation6 + $0x30] sm:$0xff]
    %v239 = vld [vmem:[#allocation6 + $0x38] sm:$0xff]
    %v240 = vld [vmem:[#allocation6 + $0x40] sm:$0xff]
    %v241 = vld [vmem:[#allocation6 + $0x48] sm:$0xff]
    %v242 = vld [vmem:[#allocation6 + $0x50] sm:$0xff]
    %v243 = vld [vmem:[#allocation6 + $0x58] sm:$0xff]
    %v244 = vld [vmem:[#allocation6 + $0x60] sm:$0xff]
    %v245 = vld [vmem:[#allocation6 + $0x68] sm:$0xff]
    %v246 = vld [vmem:[#allocation6 + $0x70] sm:$0xff]
    %v247 = vld [vmem:[#allocation6 + $0x78] sm:$0xff]
    %v249 = vsel %vm107, %v217, 0
    %251 = vmatprep.subr.mxu0 %v233
    %252 = vmatpush1.msra.mxu0 %v232
    %253 = vmatprep.subr.mxu0 %v235
    %254 = vmatpush1.msra.mxu0 %v234
    %255 = vmatprep.subr.mxu0 %v237
    %256 = vmatpush1.msra.mxu0 %v236
    %257 = vmatprep.subr.mxu0 %v239
    %258 = vmatpush1.msra.mxu0 %v238
    %259 = vmatprep.subr.mxu0 %v241
    %260 = vmatpush1.msra.mxu0 %v240
    %261 = vmatprep.subr.mxu0 %v243
    %262 = vmatpush1.msra.mxu0 %v242
    %263 = vmatprep.subr.mxu0 %v245
    %264 = vmatpush1.msra.mxu0 %v244
    %265 = vmatprep.subr.mxu0 %v247
    %266 = vmatpush1.msra.mxu0 %v246
    %267 = vmatprep.subr.mxu0 0.0
    %268 = vmatpush1.msra.mxu0 0.0
    %269 = vmatprep.subr.mxu0 0.0
    %270 = vmatpush1.msra.mxu0 0.0
    %271 = vmatprep.subr.mxu0 0.0
    %272 = vmatpush1.msra.mxu0 0.0
    %273 = vmatprep.subr.mxu0 0.0
    %274 = vmatpush1.msra.mxu0 0.0
    %275 = vmatprep.subr.mxu0 0.0
    %276 = vmatpush1.msra.mxu0 0.0
    %277 = vmatprep.subr.mxu0 0.0
    %278 = vmatpush1.msra.mxu0 0.0
    %279 = vmatprep.subr.mxu0 0.0
    %280 = vmatpush1.msra.mxu0 0.0
    %281 = vmatprep.subr.mxu0 0.0
    %282 = vmatpush1.msra.mxu0 0.0
    %283 = vmatprep.subr.mxu0 0.0
    %284 = vmatpush1.msra.mxu0 0.0
    %285 = vmatprep.subr.mxu0 0.0
    %286 = vmatpush1.msra.mxu0 0.0
    %287 = vmatprep.subr.mxu0 0.0
    %288 = vmatpush1.msra.mxu0 0.0
    %289 = vmatprep.subr.mxu0 0.0
    %290 = vmatpush1.msra.mxu0 0.0
    %291 = vmatprep.subr.mxu0 0.0
    %292 = vmatpush1.msra.mxu0 0.0
    %293 = vmatprep.subr.mxu0 0.0
    %294 = vmatpush1.msra.mxu0 0.0
    %295 = vmatprep.subr.mxu0 0.0
    %296 = vmatpush1.msra.mxu0 0.0
    %297 = vmatprep.subr.mxu0 0.0
    %298 = vmatpush1.msra.mxu0 0.0
    %299 = vmatprep.subr.mxu0 0.0
    %300 = vmatpush1.msra.mxu0 0.0
    %301 = vmatprep.subr.mxu0 0.0
    %302 = vmatpush1.msra.mxu0 0.0
    %303 = vmatprep.subr.mxu0 0.0
    %304 = vmatpush1.msra.mxu0 0.0
    %305 = vmatprep.subr.mxu0 0.0
    %306 = vmatpush1.msra.mxu0 0.0
    %307 = vmatprep.subr.mxu0 0.0
    %308 = vmatpush1.msra.mxu0 0.0
    %309 = vmatprep.subr.mxu0 0.0
    %310 = vmatpush1.msra.mxu0 0.0
    %311 = vmatprep.subr.mxu0 0.0
    %312 = vmatpush1.msra.mxu0 0.0
    %313 = vmatprep.subr.mxu0 0.0
    %314 = vmatpush1.msra.mxu0 0.0
    %315 = vmatprep.mubr.f32.mxu0 0.0
    %316 = vmatmul.mubr.f32.gmra.mrb[0].mxu0 %v249
    %v317 = vpop.f32.mrb[0].mxu0
    %v318 = vadd.f32 0.0, %v317
    %v319 = vpop.f32.mrb[0].mxu0
    %v320 = vadd.f32 0.0, %v319
    %321 = vdwg.mxu0
    %v322 = vadd.f32 %v230, %v318
    %v323 = vadd.f32 %v231, %v320
    %v324 = vxor.u32 %v322, 2147483648
    %v325 = vxor.u32 %v323, 2147483648
    %v326 = vmul.f32 %v324, 1.442695
    %v327 = vpow.pop %v326
    %v328 = vmul.f32 %v325, 1.442695
    %v329 = vpow.pop %v328
    %v330 = vadd.f32 %v327, 1.0
    %v331 = vadd.f32 %v329, 1.0
    %v332 = vrcp.pop %v330
    %v333 = vmul.f32 1.0, %v332
    %v334 = vrcp.pop %v331
    %v335 = vmul.f32 1.0, %v334
    %v336 = vtanh.pop %v323
    %338 = vrot.lane.b32.xlu0 %v223, 64
    %v339 = vpop.permute.xlu0 %338
    %v341 = vmul.f32 %v333, %v339
    %343 = vrot.lane.b32.xlu0 %v336, 64
    %v344 = vpop.permute.xlu0 %343
    %v346 = vmul.f32 %v333, %v344
    %348 = vrot.lane.b32.xlu0 %v346, 64
    %v349 = vpop.permute.xlu0 %348
    %v351 = vadd.f32 %v341, %v349
    %v352 = vtanh.pop %v351
    %354 = vrot.lane.b32.xlu0 %v352, 64
    %v355 = vpop.permute.xlu0 %354
    %v357 = vmul.f32 %v335, %v355
    %vm358 = vcmp.le.s32.totalorder %v83, 1
    %vm359 = vcmp.gt.s32.totalorder %v81, 1
    %vm360 = vmand %vm358, %vm359
    %v361 = vsel %vm360, %v357, 0.0
    %s362 = scalar_lea.vmem [#allocation2], 8
    %363 = vst.msk [vmem:[%s362] sm:$0xff] %vm107, %v361
    %v364 = vsel %vm360, %v357, %v217
    %366 = vrot.lane.b32.xlu0 %v351, 64
    %v367 = vpop.permute.xlu0 %366
    %v369 = vsel %vm360, %v367, %v223
    %s370 = scalar_lea.vmem [#allocation3], 32
    %v371 = vld [vmem:[%s370] sm:$0xff]
    %v372 = vld [vmem:[%s370 + $0x8] sm:$0xff]
    %s373 = scalar_lea.vmem [#allocation3], 80
    %v374 = vld [vmem:[%s373] sm:$0xff]
    %v375 = vld [vmem:[%s373 + $0x8] sm:$0xff]
    %v376 = vsel %vm79, %v371, %v374
    %v377 = vsel %vm80, %v372, %v375
    %v378 = vld [vmem:[#allocation6] sm:$0xff]
    %v379 = vld [vmem:[#allocation6 + $0x8] sm:$0xff]
    %v380 = vld [vmem:[#allocation6 + $0x10] sm:$0xff]
    %v381 = vld [vmem:[#allocation6 + $0x18] sm:$0xff]
    %v382 = vld [vmem:[#allocation6 + $0x20] sm:$0xff]
    %v383 = vld [vmem:[#allocation6 + $0x28] sm:$0xff]
    %v384 = vld [vmem:[#allocation6 + $0x30] sm:$0xff]
    %v385 = vld [vmem:[#allocation6 + $0x38] sm:$0xff]
    %v386 = vld [vmem:[#allocation6 + $0x40] sm:$0xff]
    %v387 = vld [vmem:[#allocation6 + $0x48] sm:$0xff]
    %v388 = vld [vmem:[#allocation6 + $0x50] sm:$0xff]
    %v389 = vld [vmem:[#allocation6 + $0x58] sm:$0xff]
    %v390 = vld [vmem:[#allocation6 + $0x60] sm:$0xff]
    %v391 = vld [vmem:[#allocation6 + $0x68] sm:$0xff]
    %v392 = vld [vmem:[#allocation6 + $0x70] sm:$0xff]
    %v393 = vld [vmem:[#allocation6 + $0x78] sm:$0xff]
    %v395 = vsel %vm107, %v364, 0
    %397 = vmatprep.subr.mxu0 %v379
    %398 = vmatpush1.msra.mxu0 %v378
    %399 = vmatprep.subr.mxu0 %v381
    %400 = vmatpush1.msra.mxu0 %v380
    %401 = vmatprep.subr.mxu0 %v383
    %402 = vmatpush1.msra.mxu0 %v382
    %403 = vmatprep.subr.mxu0 %v385
    %404 = vmatpush1.msra.mxu0 %v384
    %405 = vmatprep.subr.mxu0 %v387
    %406 = vmatpush1.msra.mxu0 %v386
    %407 = vmatprep.subr.mxu0 %v389
    %408 = vmatpush1.msra.mxu0 %v388
    %409 = vmatprep.subr.mxu0 %v391
    %410 = vmatpush1.msra.mxu0 %v390
    %411 = vmatprep.subr.mxu0 %v393
    %412 = vmatpush1.msra.mxu0 %v392
    %413 = vmatprep.subr.mxu0 0.0
    %414 = vmatpush1.msra.mxu0 0.0
    %415 = vmatprep.subr.mxu0 0.0
    %416 = vmatpush1.msra.mxu0 0.0
    %417 = vmatprep.subr.mxu0 0.0
    %418 = vmatpush1.msra.mxu0 0.0
    %419 = vmatprep.subr.mxu0 0.0
    %420 = vmatpush1.msra.mxu0 0.0
    %421 = vmatprep.subr.mxu0 0.0
    %422 = vmatpush1.msra.mxu0 0.0
    %423 = vmatprep.subr.mxu0 0.0
    %424 = vmatpush1.msra.mxu0 0.0
    %425 = vmatprep.subr.mxu0 0.0
    %426 = vmatpush1.msra.mxu0 0.0
    %427 = vmatprep.subr.mxu0 0.0
    %428 = vmatpush1.msra.mxu0 0.0
    %429 = vmatprep.subr.mxu0 0.0
    %430 = vmatpush1.msra.mxu0 0.0
    %431 = vmatprep.subr.mxu0 0.0
    %432 = vmatpush1.msra.mxu0 0.0
    %433 = vmatprep.subr.mxu0 0.0
    %434 = vmatpush1.msra.mxu0 0.0
    %435 = vmatprep.subr.mxu0 0.0
    %436 = vmatpush1.msra.mxu0 0.0
    %437 = vmatprep.subr.mxu0 0.0
    %438 = vmatpush1.msra.mxu0 0.0
    %439 = vmatprep.subr.mxu0 0.0
    %440 = vmatpush1.msra.mxu0 0.0
    %441 = vmatprep.subr.mxu0 0.0
    %442 = vmatpush1.msra.mxu0 0.0
    %443 = vmatprep.subr.mxu0 0.0
    %444 = vmatpush1.msra.mxu0 0.0
    %445 = vmatprep.subr.mxu0 0.0
    %446 = vmatpush1.msra.mxu0 0.0
    %447 = vmatprep.subr.mxu0 0.0
    %448 = vmatpush1.msra.mxu0 0.0
    %449 = vmatprep.subr.mxu0 0.0
    %450 = vmatpush1.msra.mxu0 0.0
    %451 = vmatprep.subr.mxu0 0.0
    %452 = vmatpush1.msra.mxu0 0.0
    %453 = vmatprep.subr.mxu0 0.0
    %454 = vmatpush1.msra.mxu0 0.0
    %455 = vmatprep.subr.mxu0 0.0
    %456 = vmatpush1.msra.mxu0 0.0
    %457 = vmatprep.subr.mxu0 0.0
    %458 = vmatpush1.msra.mxu0 0.0
    %459 = vmatprep.subr.mxu0 0.0
    %460 = vmatpush1.msra.mxu0 0.0
    %461 = vmatprep.mubr.f32.mxu0 0.0
    %462 = vmatmul.mubr.f32.gmra.mrb[0].mxu0 %v395
    %v463 = vpop.f32.mrb[0].mxu0
    %v464 = vadd.f32 0.0, %v463
    %v465 = vpop.f32.mrb[0].mxu0
    %v466 = vadd.f32 0.0, %v465
    %467 = vdwg.mxu0
    %v468 = vadd.f32 %v376, %v464
    %v469 = vadd.f32 %v377, %v466
    %v470 = vxor.u32 %v468, 2147483648
    %v471 = vxor.u32 %v469, 2147483648
    %v472 = vmul.f32 %v470, 1.442695
    %v473 = vpow.pop %v472
    %v474 = vmul.f32 %v471, 1.442695
    %v475 = vpow.pop %v474
    %v476 = vadd.f32 %v473, 1.0
    %v477 = vadd.f32 %v475, 1.0
    %v478 = vrcp.pop %v476
    %v479 = vmul.f32 1.0, %v478
    %v480 = vrcp.pop %v477
    %v481 = vmul.f32 1.0, %v480
    %v482 = vtanh.pop %v469
    %484 = vrot.lane.b32.xlu0 %v369, 64
    %v485 = vpop.permute.xlu0 %484
    %v487 = vmul.f32 %v479, %v485
    %489 = vrot.lane.b32.xlu0 %v482, 64
    %v490 = vpop.permute.xlu0 %489
    %v492 = vmul.f32 %v479, %v490
    %494 = vrot.lane.b32.xlu0 %v492, 64
    %v495 = vpop.permute.xlu0 %494
    %v497 = vadd.f32 %v487, %v495
    %v498 = vtanh.pop %v497
    %500 = vrot.lane.b32.xlu0 %v498, 64
    %v501 = vpop.permute.xlu0 %500
    %v503 = vmul.f32 %v481, %v501
    %vm504 = vcmp.le.s32.totalorder %v83, 2
    %vm505 = vcmp.gt.s32.totalorder %v81, 2
    %vm506 = vmand %vm504, %vm505
    %v507 = vsel %vm506, %v503, 0.0
    %s508 = scalar_lea.vmem [#allocation2], 16
    %509 = vst.msk [vmem:[%s508] sm:$0xff] %vm107, %v507
    %v510 = vsel %vm506, %v503, %v364
    %512 = vrot.lane.b32.xlu0 %v497, 64
    %v513 = vpop.permute.xlu0 %512
    %v515 = vsel %vm506, %v513, %v369
    %s516 = scalar_lea.vmem [#allocation3], 48
    %v517 = vld [vmem:[%s516] sm:$0xff]
    %v518 = vld [vmem:[%s516 + $0x8] sm:$0xff]
    %s519 = scalar_lea.vmem [#allocation3], 64
    %v520 = vld [vmem:[%s519] sm:$0xff]
    %v521 = vld [vmem:[%s519 + $0x8] sm:$0xff]
    %v522 = vsel %vm79, %v517, %v520
    %v523 = vsel %vm80, %v518, %v521
    %v524 = vld [vmem:[#allocation6] sm:$0xff]
    %v525 = vld [vmem:[#allocation6 + $0x8] sm:$0xff]
    %v526 = vld [vmem:[#allocation6 + $0x10] sm:$0xff]
    %v527 = vld [vmem:[#allocation6 + $0x18] sm:$0xff]
    %v528 = vld [vmem:[#allocation6 + $0x20] sm:$0xff]
    %v529 = vld [vmem:[#allocation6 + $0x28] sm:$0xff]
    %v530 = vld [vmem:[#allocation6 + $0x30] sm:$0xff]
    %v531 = vld [vmem:[#allocation6 + $0x38] sm:$0xff]
    %v532 = vld [vmem:[#allocation6 + $0x40] sm:$0xff]
    %v533 = vld [vmem:[#allocation6 + $0x48] sm:$0xff]
    %v534 = vld [vmem:[#allocation6 + $0x50] sm:$0xff]
    %v535 = vld [vmem:[#allocation6 + $0x58] sm:$0xff]
    %v536 = vld [vmem:[#allocation6 + $0x60] sm:$0xff]
    %v537 = vld [vmem:[#allocation6 + $0x68] sm:$0xff]
    %v538 = vld [vmem:[#allocation6 + $0x70] sm:$0xff]
    %v539 = vld [vmem:[#allocation6 + $0x78] sm:$0xff]
    %v541 = vsel %vm107, %v510, 0
    %543 = vmatprep.subr.mxu0 %v525
    %544 = vmatpush1.msra.mxu0 %v524
    %545 = vmatprep.subr.mxu0 %v527
    %546 = vmatpush1.msra.mxu0 %v526
    %547 = vmatprep.subr.mxu0 %v529
    %548 = vmatpush1.msra.mxu0 %v528
    %549 = vmatprep.subr.mxu0 %v531
    %550 = vmatpush1.msra.mxu0 %v530
    %551 = vmatprep.subr.mxu0 %v533
    %552 = vmatpush1.msra.mxu0 %v532
    %553 = vmatprep.subr.mxu0 %v535
    %554 = vmatpush1.msra.mxu0 %v534
    %555 = vmatprep.subr.mxu0 %v537
    %556 = vmatpush1.msra.mxu0 %v536
    %557 = vmatprep.subr.mxu0 %v539
    %558 = vmatpush1.msra.mxu0 %v538
    %559 = vmatprep.subr.mxu0 0.0
    %560 = vmatpush1.msra.mxu0 0.0
    %561 = vmatprep.subr.mxu0 0.0
    %562 = vmatpush1.msra.mxu0 0.0
    %563 = vmatprep.subr.mxu0 0.0
    %564 = vmatpush1.msra.mxu0 0.0
    %565 = vmatprep.subr.mxu0 0.0
    %566 = vmatpush1.msra.mxu0 0.0
    %567 = vmatprep.subr.mxu0 0.0
    %568 = vmatpush1.msra.mxu0 0.0
    %569 = vmatprep.subr.mxu0 0.0
    %570 = vmatpush1.msra.mxu0 0.0
    %571 = vmatprep.subr.mxu0 0.0
    %572 = vmatpush1.msra.mxu0 0.0
    %573 = vmatprep.subr.mxu0 0.0
    %574 = vmatpush1.msra.mxu0 0.0
    %575 = vmatprep.subr.mxu0 0.0
    %576 = vmatpush1.msra.mxu0 0.0
    %577 = vmatprep.subr.mxu0 0.0
    %578 = vmatpush1.msra.mxu0 0.0
    %579 = vmatprep.subr.mxu0 0.0
    %580 = vmatpush1.msra.mxu0 0.0
    %581 = vmatprep.subr.mxu0 0.0
    %582 = vmatpush1.msra.mxu0 0.0
    %583 = vmatprep.subr.mxu0 0.0
    %584 = vmatpush1.msra.mxu0 0.0
    %585 = vmatprep.subr.mxu0 0.0
    %586 = vmatpush1.msra.mxu0 0.0
    %587 = vmatprep.subr.mxu0 0.0
    %588 = vmatpush1.msra.mxu0 0.0
    %589 = vmatprep.subr.mxu0 0.0
    %590 = vmatpush1.msra.mxu0 0.0
    %591 = vmatprep.subr.mxu0 0.0
    %592 = vmatpush1.msra.mxu0 0.0
    %593 = vmatprep.subr.mxu0 0.0
    %594 = vmatpush1.msra.mxu0 0.0
    %595 = vmatprep.subr.mxu0 0.0
    %596 = vmatpush1.msra.mxu0 0.0
    %597 = vmatprep.subr.mxu0 0.0
    %598 = vmatpush1.msra.mxu0 0.0
    %599 = vmatprep.subr.mxu0 0.0
    %600 = vmatpush1.msra.mxu0 0.0
    %601 = vmatprep.subr.mxu0 0.0
    %602 = vmatpush1.msra.mxu0 0.0
    %603 = vmatprep.subr.mxu0 0.0
    %604 = vmatpush1.msra.mxu0 0.0
    %605 = vmatprep.subr.mxu0 0.0
    %606 = vmatpush1.msra.mxu0 0.0
    %607 = vmatprep.mubr.f32.mxu0 0.0
    %608 = vmatmul.mubr.f32.gmra.mrb[0].mxu0 %v541
    %v609 = vpop.f32.mrb[0].mxu0
    %v610 = vadd.f32 0.0, %v609
    %v611 = vpop.f32.mrb[0].mxu0
    %v612 = vadd.f32 0.0, %v611
    %613 = vdwg.mxu0
    %v614 = vadd.f32 %v522, %v610
    %v615 = vadd.f32 %v523, %v612
    %v616 = vxor.u32 %v614, 2147483648
    %v617 = vxor.u32 %v615, 2147483648
    %v618 = vmul.f32 %v616, 1.442695
    %v619 = vpow.pop %v618
    %v620 = vmul.f32 %v617, 1.442695
    %v621 = vpow.pop %v620
    %v622 = vadd.f32 %v619, 1.0
    %v623 = vadd.f32 %v621, 1.0
    %v624 = vrcp.pop %v622
    %v625 = vmul.f32 1.0, %v624
    %v626 = vrcp.pop %v623
    %v627 = vmul.f32 1.0, %v626
    %v628 = vtanh.pop %v615
    %630 = vrot.lane.b32.xlu0 %v515, 64
    %v631 = vpop.permute.xlu0 %630
    %v633 = vmul.f32 %v625, %v631
    %635 = vrot.lane.b32.xlu0 %v628, 64
    %v636 = vpop.permute.xlu0 %635
    %v638 = vmul.f32 %v625, %v636
    %640 = vrot.lane.b32.xlu0 %v638, 64
    %v641 = vpop.permute.xlu0 %640
    %v643 = vadd.f32 %v633, %v641
    %v644 = vtanh.pop %v643
    %646 = vrot.lane.b32.xlu0 %v644, 64
    %v647 = vpop.permute.xlu0 %646
    %v649 = vmul.f32 %v627, %v647
    %vm650 = vcmp.le.s32.totalorder %v83, 3
    %vm651 = vcmp.gt.s32.totalorder %v81, 3
    %vm652 = vmand %vm650, %vm651
    %v653 = vsel %vm652, %v649, 0.0
    %s654 = scalar_lea.vmem [#allocation2], 24
    %655 = vst.msk [vmem:[%s654] sm:$0xff] %vm107, %v653
    %v656 = vsel %vm652, %v649, %v510
    %658 = vrot.lane.b32.xlu0 %v643, 64
    %v659 = vpop.permute.xlu0 %658
    %v661 = vsel %vm652, %v659, %v515
    %v662 = vld [vmem:[%s519] sm:$0xff]
    %v663 = vld [vmem:[%s519 + $0x8] sm:$0xff]
    %v664 = vld [vmem:[%s516] sm:$0xff]
    %v665 = vld [vmem:[%s516 + $0x8] sm:$0xff]
    %v666 = vsel %vm79, %v662, %v664
    %v667 = vsel %vm80, %v663, %v665
    %v668 = vld [vmem:[#allocation6] sm:$0xff]
    %v669 = vld [vmem:[#allocation6 + $0x8] sm:$0xff]
    %v670 = vld [vmem:[#allocation6 + $0x10] sm:$0xff]
    %v671 = vld [vmem:[#allocation6 + $0x18] sm:$0xff]
    %v672 = vld [vmem:[#allocation6 + $0x20] sm:$0xff]
    %v673 = vld [vmem:[#allocation6 + $0x28] sm:$0xff]
    %v674 = vld [vmem:[#allocation6 + $0x30] sm:$0xff]
    %v675 = vld [vmem:[#allocation6 + $0x38] sm:$0xff]
    %v676 = vld [vmem:[#allocation6 + $0x40] sm:$0xff]
    %v677 = vld [vmem:[#allocation6 + $0x48] sm:$0xff]
    %v678 = vld [vmem:[#allocation6 + $0x50] sm:$0xff]
    %v679 = vld [vmem:[#allocation6 + $0x58] sm:$0xff]
    %v680 = vld [vmem:[#allocation6 + $0x60] sm:$0xff]
    %v681 = vld [vmem:[#allocation6 + $0x68] sm:$0xff]
    %v682 = vld [vmem:[#allocation6 + $0x70] sm:$0xff]
    %v683 = vld [vmem:[#allocation6 + $0x78] sm:$0xff]
    %v685 = vsel %vm107, %v656, 0
    %687 = vmatprep.subr.mxu0 %v669
    %688 = vmatpush1.msra.mxu0 %v668
    %689 = vmatprep.subr.mxu0 %v671
    %690 = vmatpush1.msra.mxu0 %v670
    %691 = vmatprep.subr.mxu0 %v673
    %692 = vmatpush1.msra.mxu0 %v672
    %693 = vmatprep.subr.mxu0 %v675
    %694 = vmatpush1.msra.mxu0 %v674
    %695 = vmatprep.subr.mxu0 %v677
    %696 = vmatpush1.msra.mxu0 %v676
    %697 = vmatprep.subr.mxu0 %v679
    %698 = vmatpush1.msra.mxu0 %v678
    %699 = vmatprep.subr.mxu0 %v681
    %700 = vmatpush1.msra.mxu0 %v680
    %701 = vmatprep.subr.mxu0 %v683
    %702 = vmatpush1.msra.mxu0 %v682
    %703 = vmatprep.subr.mxu0 0.0
    %704 = vmatpush1.msra.mxu0 0.0
    %705 = vmatprep.subr.mxu0 0.0
    %706 = vmatpush1.msra.mxu0 0.0
    %707 = vmatprep.subr.mxu0 0.0
    %708 = vmatpush1.msra.mxu0 0.0
    %709 = vmatprep.subr.mxu0 0.0
    %710 = vmatpush1.msra.mxu0 0.0
    %711 = vmatprep.subr.mxu0 0.0
    %712 = vmatpush1.msra.mxu0 0.0
    %713 = vmatprep.subr.mxu0 0.0
    %714 = vmatpush1.msra.mxu0 0.0
    %715 = vmatprep.subr.mxu0 0.0
    %716 = vmatpush1.msra.mxu0 0.0
    %717 = vmatprep.subr.mxu0 0.0
    %718 = vmatpush1.msra.mxu0 0.0
    %719 = vmatprep.subr.mxu0 0.0
    %720 = vmatpush1.msra.mxu0 0.0
    %721 = vmatprep.subr.mxu0 0.0
    %722 = vmatpush1.msra.mxu0 0.0
    %723 = vmatprep.subr.mxu0 0.0
    %724 = vmatpush1.msra.mxu0 0.0
    %725 = vmatprep.subr.mxu0 0.0
    %726 = vmatpush1.msra.mxu0 0.0
    %727 = vmatprep.subr.mxu0 0.0
    %728 = vmatpush1.msra.mxu0 0.0
    %729 = vmatprep.subr.mxu0 0.0
    %730 = vmatpush1.msra.mxu0 0.0
    %731 = vmatprep.subr.mxu0 0.0
    %732 = vmatpush1.msra.mxu0 0.0
    %733 = vmatprep.subr.mxu0 0.0
    %734 = vmatpush1.msra.mxu0 0.0
    %735 = vmatprep.subr.mxu0 0.0
    %736 = vmatpush1.msra.mxu0 0.0
    %737 = vmatprep.subr.mxu0 0.0
    %738 = vmatpush1.msra.mxu0 0.0
    %739 = vmatprep.subr.mxu0 0.0
    %740 = vmatpush1.msra.mxu0 0.0
    %741 = vmatprep.subr.mxu0 0.0
    %742 = vmatpush1.msra.mxu0 0.0
    %743 = vmatprep.subr.mxu0 0.0
    %744 = vmatpush1.msra.mxu0 0.0
    %745 = vmatprep.subr.mxu0 0.0
    %746 = vmatpush1.msra.mxu0 0.0
    %747 = vmatprep.subr.mxu0 0.0
    %748 = vmatpush1.msra.mxu0 0.0
    %749 = vmatprep.subr.mxu0 0.0
    %750 = vmatpush1.msra.mxu0 0.0
    %751 = vmatprep.mubr.f32.mxu0 0.0
    %752 = vmatmul.mubr.f32.gmra.mrb[0].mxu0 %v685
    %v753 = vpop.f32.mrb[0].mxu0
    %v754 = vadd.f32 0.0, %v753
    %v755 = vpop.f32.mrb[0].mxu0
    %v756 = vadd.f32 0.0, %v755
    %757 = vdwg.mxu0
    %v758 = vadd.f32 %v666, %v754
    %v759 = vadd.f32 %v667, %v756
    %v760 = vxor.u32 %v758, 2147483648
    %v761 = vxor.u32 %v759, 2147483648
    %v762 = vmul.f32 %v760, 1.442695
    %v763 = vpow.pop %v762
    %v764 = vmul.f32 %v761, 1.442695
    %v765 = vpow.pop %v764
    %v766 = vadd.f32 %v763, 1.0
    %v767 = vadd.f32 %v765, 1.0
    %v768 = vrcp.pop %v766
    %v769 = vmul.f32 1.0, %v768
    %v770 = vrcp.pop %v767
    %v771 = vmul.f32 1.0, %v770
    %v772 = vtanh.pop %v759
    %774 = vrot.lane.b32.xlu0 %v661, 64
    %v775 = vpop.permute.xlu0 %774
    %v777 = vmul.f32 %v769, %v775
    %779 = vrot.lane.b32.xlu0 %v772, 64
    %v780 = vpop.permute.xlu0 %779
    %v782 = vmul.f32 %v769, %v780
    %784 = vrot.lane.b32.xlu0 %v782, 64
    %v785 = vpop.permute.xlu0 %784
    %v787 = vadd.f32 %v777, %v785
    %v788 = vtanh.pop %v787
    %790 = vrot.lane.b32.xlu0 %v788, 64
    %v791 = vpop.permute.xlu0 %790
    %v793 = vmul.f32 %v771, %v791
    %vm794 = vcmp.le.s32.totalorder %v83, 4
    %vm795 = vcmp.gt.s32.totalorder %v81, 4
    %vm796 = vmand %vm794, %vm795
    %v797 = vsel %vm796, %v793, 0.0
    %s798 = scalar_lea.vmem [#allocation2], 32
    %799 = vst.msk [vmem:[%s798] sm:$0xff] %vm107, %v797
    %v800 = vsel %vm796, %v793, %v656
    %802 = vrot.lane.b32.xlu0 %v787, 64
    %v803 = vpop.permute.xlu0 %802
    %v805 = vsel %vm796, %v803, %v661
    %v806 = vld [vmem:[%s373] sm:$0xff]
    %v807 = vld [vmem:[%s373 + $0x8] sm:$0xff]
    %v808 = vld [vmem:[%s370] sm:$0xff]
    %v809 = vld [vmem:[%s370 + $0x8] sm:$0xff]
    %v810 = vsel %vm79, %v806, %v808
    %v811 = vsel %vm80, %v807, %v809
    %v812 = vld [vmem:[#allocation6] sm:$0xff]
    %v813 = vld [vmem:[#allocation6 + $0x8] sm:$0xff]
    %v814 = vld [vmem:[#allocation6 + $0x10] sm:$0xff]
    %v815 = vld [vmem:[#allocation6 + $0x18] sm:$0xff]
    %v816 = vld [vmem:[#allocation6 + $0x20] sm:$0xff]
    %v817 = vld [vmem:[#allocation6 + $0x28] sm:$0xff]
    %v818 = vld [vmem:[#allocation6 + $0x30] sm:$0xff]
    %v819 = vld [vmem:[#allocation6 + $0x38] sm:$0xff]
    %v820 = vld [vmem:[#allocation6 + $0x40] sm:$0xff]
    %v821 = vld [vmem:[#allocation6 + $0x48] sm:$0xff]
    %v822 = vld [vmem:[#allocation6 + $0x50] sm:$0xff]
    %v823 = vld [vmem:[#allocation6 + $0x58] sm:$0xff]
    %v824 = vld [vmem:[#allocation6 + $0x60] sm:$0xff]
    %v825 = vld [vmem:[#allocation6 + $0x68] sm:$0xff]
    %v826 = vld [vmem:[#allocation6 + $0x70] sm:$0xff]
    %v827 = vld [vmem:[#allocation6 + $0x78] sm:$0xff]
    %v829 = vsel %vm107, %v800, 0
    %831 = vmatprep.subr.mxu0 %v813
    %832 = vmatpush1.msra.mxu0 %v812
    %833 = vmatprep.subr.mxu0 %v815
    %834 = vmatpush1.msra.mxu0 %v814
    %835 = vmatprep.subr.mxu0 %v817
    %836 = vmatpush1.msra.mxu0 %v816
    %837 = vmatprep.subr.mxu0 %v819
    %838 = vmatpush1.msra.mxu0 %v818
    %839 = vmatprep.subr.mxu0 %v821
    %840 = vmatpush1.msra.mxu0 %v820
    %841 = vmatprep.subr.mxu0 %v823
    %842 = vmatpush1.msra.mxu0 %v822
    %843 = vmatprep.subr.mxu0 %v825
    %844 = vmatpush1.msra.mxu0 %v824
    %845 = vmatprep.subr.mxu0 %v827
    %846 = vmatpush1.msra.mxu0 %v826
    %847 = vmatprep.subr.mxu0 0.0
    %848 = vmatpush1.msra.mxu0 0.0
    %849 = vmatprep.subr.mxu0 0.0
    %850 = vmatpush1.msra.mxu0 0.0
    %851 = vmatprep.subr.mxu0 0.0
    %852 = vmatpush1.msra.mxu0 0.0
    %853 = vmatprep.subr.mxu0 0.0
    %854 = vmatpush1.msra.mxu0 0.0
    %855 = vmatprep.subr.mxu0 0.0
    %856 = vmatpush1.msra.mxu0 0.0
    %857 = vmatprep.subr.mxu0 0.0
    %858 = vmatpush1.msra.mxu0 0.0
    %859 = vmatprep.subr.mxu0 0.0
    %860 = vmatpush1.msra.mxu0 0.0
    %861 = vmatprep.subr.mxu0 0.0
    %862 = vmatpush1.msra.mxu0 0.0
    %863 = vmatprep.subr.mxu0 0.0
    %864 = vmatpush1.msra.mxu0 0.0
    %865 = vmatprep.subr.mxu0 0.0
    %866 = vmatpush1.msra.mxu0 0.0
    %867 = vmatprep.subr.mxu0 0.0
    %868 = vmatpush1.msra.mxu0 0.0
    %869 = vmatprep.subr.mxu0 0.0
    %870 = vmatpush1.msra.mxu0 0.0
    %871 = vmatprep.subr.mxu0 0.0
    %872 = vmatpush1.msra.mxu0 0.0
    %873 = vmatprep.subr.mxu0 0.0
    %874 = vmatpush1.msra.mxu0 0.0
    %875 = vmatprep.subr.mxu0 0.0
    %876 = vmatpush1.msra.mxu0 0.0
    %877 = vmatprep.subr.mxu0 0.0
    %878 = vmatpush1.msra.mxu0 0.0
    %879 = vmatprep.subr.mxu0 0.0
    %880 = vmatpush1.msra.mxu0 0.0
    %881 = vmatprep.subr.mxu0 0.0
    %882 = vmatpush1.msra.mxu0 0.0
    %883 = vmatprep.subr.mxu0 0.0
    %884 = vmatpush1.msra.mxu0 0.0
    %885 = vmatprep.subr.mxu0 0.0
    %886 = vmatpush1.msra.mxu0 0.0
    %887 = vmatprep.subr.mxu0 0.0
    %888 = vmatpush1.msra.mxu0 0.0
    %889 = vmatprep.subr.mxu0 0.0
    %890 = vmatpush1.msra.mxu0 0.0
    %891 = vmatprep.subr.mxu0 0.0
    %892 = vmatpush1.msra.mxu0 0.0
    %893 = vmatprep.subr.mxu0 0.0
    %894 = vmatpush1.msra.mxu0 0.0
    %895 = vmatprep.mubr.f32.mxu0 0.0
    %896 = vmatmul.mubr.f32.gmra.mrb[0].mxu0 %v829
    %v897 = vpop.f32.mrb[0].mxu0
    %v898 = vadd.f32 0.0, %v897
    %v899 = vpop.f32.mrb[0].mxu0
    %v900 = vadd.f32 0.0, %v899
    %901 = vdwg.mxu0
    %v902 = vadd.f32 %v810, %v898
    %v903 = vadd.f32 %v811, %v900
    %v904 = vxor.u32 %v902, 2147483648
    %v905 = vxor.u32 %v903, 2147483648
    %v906 = vmul.f32 %v904, 1.442695
    %v907 = vpow.pop %v906
    %v908 = vmul.f32 %v905, 1.442695
    %v909 = vpow.pop %v908
    %v910 = vadd.f32 %v907, 1.0
    %v911 = vadd.f32 %v909, 1.0
    %v912 = vrcp.pop %v910
    %v913 = vmul.f32 1.0, %v912
    %v914 = vrcp.pop %v911
    %v915 = vmul.f32 1.0, %v914
    %v916 = vtanh.pop %v903
    %918 = vrot.lane.b32.xlu0 %v805, 64
    %v919 = vpop.permute.xlu0 %918
    %v921 = vmul.f32 %v913, %v919
    %923 = vrot.lane.b32.xlu0 %v916, 64
    %v924 = vpop.permute.xlu0 %923
    %v926 = vmul.f32 %v913, %v924
    %928 = vrot.lane.b32.xlu0 %v926, 64
    %v929 = vpop.permute.xlu0 %928
    %v931 = vadd.f32 %v921, %v929
    %v932 = vtanh.pop %v931
    %934 = vrot.lane.b32.xlu0 %v932, 64
    %v935 = vpop.permute.xlu0 %934
    %v937 = vmul.f32 %v915, %v935
    %vm938 = vcmp.le.s32.totalorder %v83, 5
    %vm939 = vcmp.gt.s32.totalorder %v81, 5
    %vm940 = vmand %vm938, %vm939
    %v941 = vsel %vm940, %v937, 0.0
    %s942 = scalar_lea.vmem [#allocation2], 40
    %943 = vst.msk [vmem:[%s942] sm:$0xff] %vm107, %v941
    %v944 = vsel %vm940, %v937, %v800
    %946 = vrot.lane.b32.xlu0 %v931, 64
    %v947 = vpop.permute.xlu0 %946
    %v949 = vsel %vm940, %v947, %v805
    %v950 = vld [vmem:[%s227] sm:$0xff]
    %v951 = vld [vmem:[%s227 + $0x8] sm:$0xff]
    %v952 = vld [vmem:[%s224] sm:$0xff]
    %v953 = vld [vmem:[%s224 + $0x8] sm:$0xff]
    %v954 = vsel %vm79, %v950, %v952
    %v955 = vsel %vm80, %v951, %v953
    %v956 = vld [vmem:[#allocation6] sm:$0xff]
    %v957 = vld [vmem:[#allocation6 + $0x8] sm:$0xff]
    %v958 = vld [vmem:[#allocation6 + $0x10] sm:$0xff]
    %v959 = vld [vmem:[#allocation6 + $0x18] sm:$0xff]
    %v960 = vld [vmem:[#allocation6 + $0x20] sm:$0xff]
    %v961 = vld [vmem:[#allocation6 + $0x28] sm:$0xff]
    %v962 = vld [vmem:[#allocation6 + $0x30] sm:$0xff]
    %v963 = vld [vmem:[#allocation6 + $0x38] sm:$0xff]
    %v964 = vld [vmem:[#allocation6 + $0x40] sm:$0xff]
    %v965 = vld [vmem:[#allocation6 + $0x48] sm:$0xff]
    %v966 = vld [vmem:[#allocation6 + $0x50] sm:$0xff]
    %v967 = vld [vmem:[#allocation6 + $0x58] sm:$0xff]
    %v968 = vld [vmem:[#allocation6 + $0x60] sm:$0xff]
    %v969 = vld [vmem:[#allocation6 + $0x68] sm:$0xff]
    %v970 = vld [vmem:[#allocation6 + $0x70] sm:$0xff]
    %v971 = vld [vmem:[#allocation6 + $0x78] sm:$0xff]
    %v973 = vsel %vm107, %v944, 0
    %975 = vmatprep.subr.mxu0 %v957
    %976 = vmatpush1.msra.mxu0 %v956
    %977 = vmatprep.subr.mxu0 %v959
    %978 = vmatpush1.msra.mxu0 %v958
    %979 = vmatprep.subr.mxu0 %v961
    %980 = vmatpush1.msra.mxu0 %v960
    %981 = vmatprep.subr.mxu0 %v963
    %982 = vmatpush1.msra.mxu0 %v962
    %983 = vmatprep.subr.mxu0 %v965
    %984 = vmatpush1.msra.mxu0 %v964
    %985 = vmatprep.subr.mxu0 %v967
    %986 = vmatpush1.msra.mxu0 %v966
    %987 = vmatprep.subr.mxu0 %v969
    %988 = vmatpush1.msra.mxu0 %v968
    %989 = vmatprep.subr.mxu0 %v971
    %990 = vmatpush1.msra.mxu0 %v970
    %991 = vmatprep.subr.mxu0 0.0
    %992 = vmatpush1.msra.mxu0 0.0
    %993 = vmatprep.subr.mxu0 0.0
    %994 = vmatpush1.msra.mxu0 0.0
    %995 = vmatprep.subr.mxu0 0.0
    %996 = vmatpush1.msra.mxu0 0.0
    %997 = vmatprep.subr.mxu0 0.0
    %998 = vmatpush1.msra.mxu0 0.0
    %999 = vmatprep.subr.mxu0 0.0
    %1000 = vmatpush1.msra.mxu0 0.0
    %1001 = vmatprep.subr.mxu0 0.0
    %1002 = vmatpush1.msra.mxu0 0.0
    %1003 = vmatprep.subr.mxu0 0.0
    %1004 = vmatpush1.msra.mxu0 0.0
    %1005 = vmatprep.subr.mxu0 0.0
    %1006 = vmatpush1.msra.mxu0 0.0
    %1007 = vmatprep.subr.mxu0 0.0
    %1008 = vmatpush1.msra.mxu0 0.0
    %1009 = vmatprep.subr.mxu0 0.0
    %1010 = vmatpush1.msra.mxu0 0.0
    %1011 = vmatprep.subr.mxu0 0.0
    %1012 = vmatpush1.msra.mxu0 0.0
    %1013 = vmatprep.subr.mxu0 0.0
    %1014 = vmatpush1.msra.mxu0 0.0
    %1015 = vmatprep.subr.mxu0 0.0
    %1016 = vmatpush1.msra.mxu0 0.0
    %1017 = vmatprep.subr.mxu0 0.0
    %1018 = vmatpush1.msra.mxu0 0.0
    %1019 = vmatprep.subr.mxu0 0.0
    %1020 = vmatpush1.msra.mxu0 0.0
    %1021 = vmatprep.subr.mxu0 0.0
    %1022 = vmatpush1.msra.mxu0 0.0
    %1023 = vmatprep.subr.mxu0 0.0
    %1024 = vmatpush1.msra.mxu0 0.0
    %1025 = vmatprep.subr.mxu0 0.0
    %1026 = vmatpush1.msra.mxu0 0.0
    %1027 = vmatprep.subr.mxu0 0.0
    %1028 = vmatpush1.msra.mxu0 0.0
    %1029 = vmatprep.subr.mxu0 0.0
    %1030 = vmatpush1.msra.mxu0 0.0
    %1031 = vmatprep.subr.mxu0 0.0
    %1032 = vmatpush1.msra.mxu0 0.0
    %1033 = vmatprep.subr.mxu0 0.0
    %1034 = vmatpush1.msra.mxu0 0.0
    %1035 = vmatprep.subr.mxu0 0.0
    %1036 = vmatpush1.msra.mxu0 0.0
    %1037 = vmatprep.subr.mxu0 0.0
    %1038 = vmatpush1.msra.mxu0 0.0
    %1039 = vmatprep.mubr.f32.mxu0 0.0
    %1040 = vmatmul.mubr.f32.gmra.mrb[0].mxu0 %v973
    %v1041 = vpop.f32.mrb[0].mxu0
    %v1042 = vadd.f32 0.0, %v1041
    %v1043 = vpop.f32.mrb[0].mxu0
    %v1044 = vadd.f32 0.0, %v1043
    %1045 = vdwg.mxu0
    %v1046 = vadd.f32 %v954, %v1042
    %v1047 = vadd.f32 %v955, %v1044
    %v1048 = vxor.u32 %v1046, 2147483648
    %v1049 = vxor.u32 %v1047, 2147483648
    %v1050 = vmul.f32 %v1048, 1.442695
    %v1051 = vpow.pop %v1050
    %v1052 = vmul.f32 %v1049, 1.442695
    %v1053 = vpow.pop %v1052
    %v1054 = vadd.f32 %v1051, 1.0
    %v1055 = vadd.f32 %v1053, 1.0
    %v1056 = vrcp.pop %v1054
    %v1057 = vmul.f32 1.0, %v1056
    %v1058 = vrcp.pop %v1055
    %v1059 = vmul.f32 1.0, %v1058
    %v1060 = vtanh.pop %v1047
    %1062 = vrot.lane.b32.xlu0 %v949, 64
    %v1063 = vpop.permute.xlu0 %1062
    %v1065 = vmul.f32 %v1057, %v1063
    %1067 = vrot.lane.b32.xlu0 %v1060, 64
    %v1068 = vpop.permute.xlu0 %1067
    %v1070 = vmul.f32 %v1057, %v1068
    %1072 = vrot.lane.b32.xlu0 %v1070, 64
    %v1073 = vpop.permute.xlu0 %1072
    %v1075 = vadd.f32 %v1065, %v1073
    %v1076 = vtanh.pop %v1075
    %1078 = vrot.lane.b32.xlu0 %v1076, 64
    %v1079 = vpop.permute.xlu0 %1078
    %v1081 = vmul.f32 %v1059, %v1079
    %vm1082 = vcmp.le.s32.totalorder %v83, 6
    %vm1083 = vcmp.gt.s32.totalorder %v81, 6
    %vm1084 = vmand %vm1082, %vm1083
    %v1085 = vsel %vm1084, %v1081, 0.0
    %s1086 = scalar_lea.vmem [#allocation2], 48
    %1087 = vst.msk [vmem:[%s1086] sm:$0xff] %vm107, %v1085
    %v1088 = vsel %vm1084, %v1081, %v944
    %1090 = vrot.lane.b32.xlu0 %v1075, 64
    %v1091 = vpop.permute.xlu0 %1090
    %v1093 = vsel %vm1084, %v1091, %v949
    %v1094 = vld [vmem:[%s86] sm:$0xff]
    %v1095 = vld [vmem:[%s86 + $0x8] sm:$0xff]
    %v1096 = vld [vmem:[#allocation3] sm:$0xff]
    %v1097 = vld [vmem:[#allocation3 + $0x8] sm:$0xff]
    %v1098 = vsel %vm79, %v1094, %v1096
    %v1099 = vsel %vm80, %v1095, %v1097
    %v1100 = vld [vmem:[#allocation6] sm:$0xff]
    %v1101 = vld [vmem:[#allocation6 + $0x8] sm:$0xff]
    %v1102 = vld [vmem:[#allocation6 + $0x10] sm:$0xff]
    %v1103 = vld [vmem:[#allocation6 + $0x18] sm:$0xff]
    %v1104 = vld [vmem:[#allocation6 + $0x20] sm:$0xff]
    %v1105 = vld [vmem:[#allocation6 + $0x28] sm:$0xff]
    %v1106 = vld [vmem:[#allocation6 + $0x30] sm:$0xff]
    %v1107 = vld [vmem:[#allocation6 + $0x38] sm:$0xff]
    %v1108 = vld [vmem:[#allocation6 + $0x40] sm:$0xff]
    %v1109 = vld [vmem:[#allocation6 + $0x48] sm:$0xff]
    %v1110 = vld [vmem:[#allocation6 + $0x50] sm:$0xff]
    %v1111 = vld [vmem:[#allocation6 + $0x58] sm:$0xff]
    %v1112 = vld [vmem:[#allocation6 + $0x60] sm:$0xff]
    %v1113 = vld [vmem:[#allocation6 + $0x68] sm:$0xff]
    %v1114 = vld [vmem:[#allocation6 + $0x70] sm:$0xff]
    %v1115 = vld [vmem:[#allocation6 + $0x78] sm:$0xff]
    %v1117 = vsel %vm107, %v1088, 0
    %1119 = vmatprep.subr.mxu0 %v1101
    %1120 = vmatpush1.msra.mxu0 %v1100
    %1121 = vmatprep.subr.mxu0 %v1103
    %1122 = vmatpush1.msra.mxu0 %v1102
    %1123 = vmatprep.subr.mxu0 %v1105
    %1124 = vmatpush1.msra.mxu0 %v1104
    %1125 = vmatprep.subr.mxu0 %v1107
    %1126 = vmatpush1.msra.mxu0 %v1106
    %1127 = vmatprep.subr.mxu0 %v1109
    %1128 = vmatpush1.msra.mxu0 %v1108
    %1129 = vmatprep.subr.mxu0 %v1111
    %1130 = vmatpush1.msra.mxu0 %v1110
    %1131 = vmatprep.subr.mxu0 %v1113
    %1132 = vmatpush1.msra.mxu0 %v1112
    %1133 = vmatprep.subr.mxu0 %v1115
    %1134 = vmatpush1.msra.mxu0 %v1114
    %1135 = vmatprep.subr.mxu0 0.0
    %1136 = vmatpush1.msra.mxu0 0.0
    %1137 = vmatprep.subr.mxu0 0.0
    %1138 = vmatpush1.msra.mxu0 0.0
    %1139 = vmatprep.subr.mxu0 0.0
    %1140 = vmatpush1.msra.mxu0 0.0
    %1141 = vmatprep.subr.mxu0 0.0
    %1142 = vmatpush1.msra.mxu0 0.0
    %1143 = vmatprep.subr.mxu0 0.0
    %1144 = vmatpush1.msra.mxu0 0.0
    %1145 = vmatprep.subr.mxu0 0.0
    %1146 = vmatpush1.msra.mxu0 0.0
    %1147 = vmatprep.subr.mxu0 0.0
    %1148 = vmatpush1.msra.mxu0 0.0
    %1149 = vmatprep.subr.mxu0 0.0
    %1150 = vmatpush1.msra.mxu0 0.0
    %1151 = vmatprep.subr.mxu0 0.0
    %1152 = vmatpush1.msra.mxu0 0.0
    %1153 = vmatprep.subr.mxu0 0.0
    %1154 = vmatpush1.msra.mxu0 0.0
    %1155 = vmatprep.subr.mxu0 0.0
    %1156 = vmatpush1.msra.mxu0 0.0
    %1157 = vmatprep.subr.mxu0 0.0
    %1158 = vmatpush1.msra.mxu0 0.0
    %1159 = vmatprep.subr.mxu0 0.0
    %1160 = vmatpush1.msra.mxu0 0.0
    %1161 = vmatprep.subr.mxu0 0.0
    %1162 = vmatpush1.msra.mxu0 0.0
    %1163 = vmatprep.subr.mxu0 0.0
    %1164 = vmatpush1.msra.mxu0 0.0
    %1165 = vmatprep.subr.mxu0 0.0
    %1166 = vmatpush1.msra.mxu0 0.0
    %1167 = vmatprep.subr.mxu0 0.0
    %1168 = vmatpush1.msra.mxu0 0.0
    %1169 = vmatprep.subr.mxu0 0.0
    %1170 = vmatpush1.msra.mxu0 0.0
    %1171 = vmatprep.subr.mxu0 0.0
    %1172 = vmatpush1.msra.mxu0 0.0
    %1173 = vmatprep.subr.mxu0 0.0
    %1174 = vmatpush1.msra.mxu0 0.0
    %1175 = vmatprep.subr.mxu0 0.0
    %1176 = vmatpush1.msra.mxu0 0.0
    %1177 = vmatprep.subr.mxu0 0.0
    %1178 = vmatpush1.msra.mxu0 0.0
    %1179 = vmatprep.subr.mxu0 0.0
    %1180 = vmatpush1.msra.mxu0 0.0
    %1181 = vmatprep.subr.mxu0 0.0
    %1182 = vmatpush1.msra.mxu0 0.0
    %1183 = vmatprep.mubr.f32.mxu0 0.0
    %1184 = vmatmul.mubr.f32.gmra.mrb[0].mxu0 %v1117
    %v1185 = vpop.f32.mrb[0].mxu0
    %v1186 = vadd.f32 0.0, %v1185
    %v1187 = vpop.f32.mrb[0].mxu0
    %v1188 = vadd.f32 0.0, %v1187
    %1189 = vdwg.mxu0
    %v1190 = vadd.f32 %v1098, %v1186
    %v1191 = vadd.f32 %v1099, %v1188
    %v1192 = vxor.u32 %v1190, 2147483648
    %v1193 = vxor.u32 %v1191, 2147483648
    %v1194 = vmul.f32 %v1192, 1.442695
    %v1195 = vpow.pop %v1194
    %v1196 = vmul.f32 %v1193, 1.442695
    %v1197 = vpow.pop %v1196
    %v1198 = vadd.f32 %v1195, 1.0
    %v1199 = vadd.f32 %v1197, 1.0
    %v1200 = vrcp.pop %v1198
    %v1201 = vmul.f32 1.0, %v1200
    %v1202 = vrcp.pop %v1199
    %v1203 = vmul.f32 1.0, %v1202
    %v1204 = vtanh.pop %v1191
    %1206 = vrot.lane.b32.xlu0 %v1093, 64
    %v1207 = vpop.permute.xlu0 %1206
    %v1209 = vmul.f32 %v1201, %v1207
    %1211 = vrot.lane.b32.xlu0 %v1204, 64
    %v1212 = vpop.permute.xlu0 %1211
    %v1214 = vmul.f32 %v1201, %v1212
    %1216 = vrot.lane.b32.xlu0 %v1214, 64
    %v1217 = vpop.permute.xlu0 %1216
    %v1219 = vadd.f32 %v1209, %v1217
    %v1220 = vtanh.pop %v1219
    %1222 = vrot.lane.b32.xlu0 %v1220, 64
    %v1223 = vpop.permute.xlu0 %1222
    %v1225 = vmul.f32 %v1203, %v1223
    %vm1226 = vcmp.le.s32.totalorder %v83, 7
    %vm1227 = vcmp.gt.s32.totalorder %v81, 7
    %vm1228 = vmand %vm1226, %vm1227
    %v1229 = vsel %vm1228, %v1225, 0.0
    %s1230 = scalar_lea.vmem [#allocation2], 56
    %1231 = vst.msk [vmem:[%s1230] sm:$0xff] %vm107, %v1229
    %v1232 = vsel %vm1228, %v1225, %v1088
    %1234 = vrot.lane.b32.xlu0 %v1219, 64
    %v1235 = vpop.permute.xlu0 %1234
    %v1237 = vsel %vm1228, %v1235, %v1093
    %v1238 = vld [vmem:[#allocation2] sm:$0xff]
    %v1239 = vld [vmem:[%s1230] sm:$0xff]
    %1241 = vrot.lane.b32.xlu0 %v1239, 96
    %v1242 = vpop.permute.xlu0 %1241
    %v1244 = vadd.f32 %v1238, %v1242
    %vm1245 = vcmask 261120
    %1246 = vst.msk [vmem:[#allocation8] sm:$0xff] %vm1245, %v1244
    %v1247 = vld [vmem:[%s362] sm:$0xff]
    %v1248 = vld [vmem:[%s1086] sm:$0xff]
    %1250 = vrot.lane.b32.xlu0 %v1248, 96
    %v1251 = vpop.permute.xlu0 %1250
    %v1253 = vadd.f32 %v1247, %v1251
    %s1254 = scalar_lea.vmem [#allocation8], 8
    %1255 = vst.msk [vmem:[%s1254] sm:$0xff] %vm1245, %v1253
    %v1256 = vld [vmem:[%s508] sm:$0xff]
    %v1257 = vld [vmem:[%s942] sm:$0xff]
    %1259 = vrot.lane.b32.xlu0 %v1257, 96
    %v1260 = vpop.permute.xlu0 %1259
    %v1262 = vadd.f32 %v1256, %v1260
    %s1263 = scalar_lea.vmem [#allocation8], 16
    %1264 = vst.msk [vmem:[%s1263] sm:$0xff] %vm1245, %v1262
    %v1265 = vld [vmem:[%s654] sm:$0xff]
    %v1266 = vld [vmem:[%s798] sm:$0xff]
    %1268 = vrot.lane.b32.xlu0 %v1266, 96
    %v1269 = vpop.permute.xlu0 %1268
    %v1271 = vadd.f32 %v1265, %v1269
    %s1272 = scalar_lea.vmem [#allocation8], 24
    %1273 = vst.msk [vmem:[%s1272] sm:$0xff] %vm1245, %v1271
    %v1274 = vld [vmem:[%s798] sm:$0xff]
    %v1275 = vld [vmem:[%s654] sm:$0xff]
    %1277 = vrot.lane.b32.xlu0 %v1275, 96
    %v1278 = vpop.permute.xlu0 %1277
    %v1280 = vadd.f32 %v1274, %v1278
    %s1281 = scalar_lea.vmem [#allocation8], 32
    %1282 = vst.msk [vmem:[%s1281] sm:$0xff] %vm1245, %v1280
    %v1283 = vld [vmem:[%s942] sm:$0xff]
    %v1284 = vld [vmem:[%s508] sm:$0xff]
    %1286 = vrot.lane.b32.xlu0 %v1284, 96
    %v1287 = vpop.permute.xlu0 %1286
    %v1289 = vadd.f32 %v1283, %v1287
    %s1290 = scalar_lea.vmem [#allocation8], 40
    %1291 = vst.msk [vmem:[%s1290] sm:$0xff] %vm1245, %v1289
    %v1292 = vld [vmem:[%s1086] sm:$0xff]
    %v1293 = vld [vmem:[%s362] sm:$0xff]
    %1295 = vrot.lane.b32.xlu0 %v1293, 96
    %v1296 = vpop.permute.xlu0 %1295
    %v1298 = vadd.f32 %v1292, %v1296
    %s1299 = scalar_lea.vmem [#allocation8], 48
    %1300 = vst.msk [vmem:[%s1299] sm:$0xff] %vm1245, %v1298
    %v1301 = vld [vmem:[%s1230] sm:$0xff]
    %v1302 = vld [vmem:[#allocation2] sm:$0xff]
    %1304 = vrot.lane.b32.xlu0 %v1302, 96
    %v1305 = vpop.permute.xlu0 %1304
    %v1307 = vadd.f32 %v1301, %v1305
    %s1308 = scalar_lea.vmem [#allocation8], 56
    %1309 = vst.msk [vmem:[%s1308] sm:$0xff] %vm1245, %v1307
    %1310 = vst.msk [vmem:[#allocation9] sm:$0xff] %vm1245, %v1232
    %1311 = vst.msk [vmem:[#allocation11] sm:$0xff] %vm1245, %v1237
    // Predicated region
    $region22: #{tpu_custom_call.1} parent=1 // pred_check
      _
    $region23: #{tpu_custom_call.1} parent=1 // pred_check_branch
      %1313 = sbr.rel (0) target = $region25
    $region24: #{tpu_custom_call.1} parent=1 // pred_region
      %s1315 = ssub.s32 1024, 1024
      %1316 = vsyncadd [#allocation5], %s1315
      %s1317 = sshll.u32 [#allocation8], 4
      %s1318 = int_to_ptr.vmem [resolvable:$true] %s1317
      %1323 = dma.vmem_to_hbm [thread:$0]  %s1318, 1024, %s3, [#allocation5], 128, 128, 8
    $region25: #{tpu_custom_call.1} parent=1 // pred_fallthru
      _
    // Predicated region
    $region26: #{tpu_custom_call.1} parent=1 // pred_check
      _
    $region27: #{tpu_custom_call.1} parent=1 // pred_check_branch
      %1325 = sbr.rel (0) target = $region29
    $region28: #{tpu_custom_call.1} parent=1 // pred_region
      %s1327 = ssub.s32 128, 128
      %1328 = vsyncadd [#allocation10], %s1327
      %s1330 = sshll.u32 [#allocation9], 4
      %s1331 = int_to_ptr.vmem [resolvable:$true] %s1330
      %1333 = dma.vmem_to_hbm [thread:$0]  %s1331, 128, %s4, [#allocation10]
    $region29: #{tpu_custom_call.1} parent=1 // pred_fallthru
      _
    // Predicated region
    $region30: #{tpu_custom_call.1} parent=1 // pred_check
      _
    $region31: #{tpu_custom_call.1} parent=1 // pred_check_branch
      %1335 = sbr.rel (0) target = $region33
    $region32: #{tpu_custom_call.1} parent=1 // pred_region
      %s1337 = ssub.s32 128, 128
      %1338 = vsyncadd [#allocation10], %s1337
      %s1340 = sshll.u32 [#allocation11], 4
      %s1341 = int_to_ptr.vmem [resolvable:$true] %s1340
      %1343 = dma.vmem_to_hbm [thread:$0]  %s1341, 128, %s5, [#allocation10]
    $region33: #{tpu_custom_call.1} parent=1 // pred_fallthru
      _
    // Predicated region
    $region34: #{tpu_custom_call.1} parent=1 // pred_check
      _
    $region35: #{tpu_custom_call.1} parent=1 // pred_check_branch
      %1345 = sbr.rel (0) target = $region37
    $region36: #{tpu_custom_call.1} parent=1 // pred_region
      %1346 = dma.done [#allocation5], 1024
    $region37: #{tpu_custom_call.1} parent=1 // pred_fallthru
      _
    // Predicated region
    $region38: #{tpu_custom_call.1} parent=1 // pred_check
      _
    $region39: #{tpu_custom_call.1} parent=1 // pred_check_branch
      %1348 = sbr.rel (0) target = $region41
    $region40: #{tpu_custom_call.1} parent=1 // pred_region
      %1349 = dma.done [#allocation10], 128
    $region41: #{tpu_custom_call.1} parent=1 // pred_fallthru
      _
    // Predicated region
    $region42: #{tpu_custom_call.1} parent=1 // pred_check
      _
    $region43: #{tpu_custom_call.1} parent=1 // pred_check_branch
      %1351 = sbr.rel (0) target = $region45
    $region44: #{tpu_custom_call.1} parent=1 // pred_region
      %1352 = dma.done [#allocation10], 128
    $region45: #{tpu_custom_call.1} parent=1 // pred_fallthru
      _
    %1353 = vsyncpa [#allocation4], 1
    %1354 = vsyncpa [#allocation7], 1
    %1355 = vsyncpa [#allocation5], 1
    %1356 = vsyncpa [#allocation10], 1

</llo_original>
